<compile_context>
chip_gen: v5e
topology: v5e:2x2
jax: 0.10.0
libtpu: 0.0.40
codegen_flags: <defaults>
</compile_context>

<pallas_src>
import functools

import jax
import jax.numpy as jnp
from jax.experimental import pallas as pl
from jax.experimental.pallas import tpu as pltpu


def _round_up(n, m):
    return ((n + m - 1) // m) * m


def _lstm_classifier_kernel(x_ref, win_ref, whh_hbm, wfc_hbm, out_ref,
                            gx_ref, whh_v, wfc_v, sems, *, T, Bp, Dp, Hp):
    # Kick off the recurrent / fc weight DMAs immediately; they overlap Phase 1
    # (and, for wfc, the whole recurrence).
    whh_cp = pltpu.make_async_copy(whh_hbm, whh_v, sems.at[0])
    wfc_cp = pltpu.make_async_copy(wfc_hbm, wfc_v, sems.at[1])
    whh_cp.start()
    wfc_cp.start()

    # Phase 1 (off the recurrent path): hoisted input projection.  The folded gate
    # bias lives in row Dp of win_ref, so this is one matmul + one broadcast add.
    gx_ref[...] = (
        jnp.dot(x_ref[...], win_ref[pl.ds(0, Dp), :],
                preferred_element_type=jnp.float32)
        + win_ref[pl.ds(Dp, 1), :])

    # Phase 2: fully unrolled recurrence.  h and c are each one (8, 128) f32 vreg.
    whh_cp.wait()
    whh = whh_v[...]
    h = jnp.zeros((Bp, Hp), jnp.float32)
    c = jnp.zeros((Bp, Hp), jnp.float32)
    for t in range(T):                         # static unroll, static offsets
        gates = gx_ref[pl.ds(t * Bp, Bp), :] + jnp.dot(
            h, whh, preferred_element_type=jnp.float32)
        # PyTorch gate order: input, forget, cell(g), output.
        # Hp = 128 => every slice below is a lane-aligned vreg view.
        i = jax.nn.sigmoid(gates[:, 0 * Hp:1 * Hp])
        f = jax.nn.sigmoid(gates[:, 1 * Hp:2 * Hp])
        g = jnp.tanh(gates[:, 2 * Hp:3 * Hp])
        o = jax.nn.sigmoid(gates[:, 3 * Hp:4 * Hp])
        c = f * c + i * g
        h = o * jnp.tanh(c)

    # Phase 3: fc head (bias is row Hp of the fc buffer); dense (8, 128) store.
    wfc_cp.wait()
    out_ref[...] = (
        jnp.dot(h, wfc_v[pl.ds(0, Hp), :], preferred_element_type=jnp.float32)
        + wfc_v[pl.ds(Hp, 1), :]).astype(out_ref.dtype)


def pack_emotion_classifier_params(w_ih, w_hh, b_ih, b_hh, w_fc, b_fc):
    """One-time layout plumbing: transpose / pad / gate-reorder / bias folding.

    Returns (w_in, whh_p, wfc_p): the three padded weight buffers the kernel
    consumes.  Call once at parameter-load time and reuse across forward calls.
    """
    _, D = w_ih.shape            # w_ih: (4H, D)
    H = w_hh.shape[1]            # w_hh: (4H, H)
    O = w_fc.shape[0]            # w_fc: (O, H)

    Dp = _round_up(D, 128)
    Hp = _round_up(max(H, 128), 128)
    Op = _round_up(max(O, 128), 128)
    f32 = jnp.float32

    # Input projection weight + folded gate bias -> one (Dp + 8, 4*Hp) buffer.
    wih = jnp.transpose(w_ih).astype(f32).reshape(D, 4, H)
    wih = jnp.pad(wih, ((0, Dp - D), (0, 0), (0, Hp - H))).reshape(Dp, 4 * Hp)
    b = (b_ih + b_hh).astype(f32).reshape(4, H)
    b = jnp.pad(b, ((0, 0), (0, Hp - H))).reshape(1, 4 * Hp)
    w_in = jnp.concatenate([wih, b], axis=0)
    w_in = jnp.pad(w_in, ((0, _round_up(Dp + 1, 8) - (Dp + 1)), (0, 0)))

    # Recurrent weight -> (Hp, 4*Hp), each gate block zero-padded to Hp lanes.
    whh = jnp.transpose(w_hh).astype(f32).reshape(H, 4, H)
    whh_p = jnp.pad(whh, ((0, Hp - H), (0, 0), (0, Hp - H))).reshape(Hp, 4 * Hp)

    # fc weight + bias -> one (Hp + 8, Op) buffer (bias is row Hp).
    wfc = jnp.pad(jnp.transpose(w_fc).astype(f32), ((0, Hp - H), (0, Op - O)))
    bfc = jnp.pad(b_fc.astype(f32), (0, Op - O)).reshape(1, Op)
    wfc_p = jnp.concatenate([wfc, bfc], axis=0)
    wfc_p = jnp.pad(wfc_p, ((0, (Hp + 8) - (Hp + 1)), (0, 0)))

    return w_in, whh_p, wfc_p


@functools.partial(jax.jit, static_argnames=("output_dim",))
def emotion_classifier_forward(x, packed, output_dim):
    """x: (B, T, D) float32, packed = pack_emotion_classifier_params(...).

    Returns logits (B, output_dim)."""
    w_in, whh_p, wfc_p = packed
    B, T, D = x.shape
    Bp = _round_up(B, 8)
    Dp = _round_up(D, 128)
    Hp = whh_p.shape[0]
    Op = wfc_p.shape[1]

    # Only activation layout work happens per call: time-major, pad, flatten.
    x_tbd = jnp.pad(jnp.transpose(x, (1, 0, 2)).astype(jnp.float32),
                    ((0, 0), (0, Bp - B), (0, Dp - D)))
    x_flat = x_tbd.reshape(T * Bp, Dp)

    kernel = functools.partial(_lstm_classifier_kernel, T=T, Bp=Bp, Dp=Dp, Hp=Hp)
    vmem_spec = pl.BlockSpec(memory_space=pltpu.MemorySpace.VMEM)
    hbm_spec = pl.BlockSpec(memory_space=pl.ANY)

    out_padded = pl.pallas_call(
        kernel,
        out_shape=jax.ShapeDtypeStruct((Bp, Op), jnp.float32),
        in_specs=[vmem_spec, vmem_spec, hbm_spec, hbm_spec],
        out_specs=vmem_spec,
        scratch_shapes=[
            pltpu.VMEM((T * Bp, 4 * Hp), jnp.float32),   # gates_x (hoisted proj)
            pltpu.VMEM((Hp, 4 * Hp), jnp.float32),       # W_hh landing buffer
            pltpu.VMEM(wfc_p.shape, jnp.float32),        # fc weight+bias buffer
            pltpu.SemaphoreType.DMA((2,)),
        ],
    )(x_flat, w_in, whh_p, wfc_p)

    return out_padded[:B, :output_dim]


def _reference_forward(x, w_ih, w_hh, b_ih, b_hh, w_fc, b_fc):
    """Pure-JAX reference mirroring nn.LSTM(batch_first=True) + nn.Linear."""
    B, T, D = x.shape
    H = w_hh.shape[1]

    def step(carry, x_t):
        h, c = carry
        gates = x_t @ w_ih.T + h @ w_hh.T + b_ih + b_hh
        i = jax.nn.sigmoid(gates[:, 0 * H:1 * H])
        f = jax.nn.sigmoid(gates[:, 1 * H:2 * H])
        g = jnp.tanh(gates[:, 2 * H:3 * H])
        o = jax.nn.sigmoid(gates[:, 3 * H:4 * H])
        c = f * c + i * g
        h = o * jnp.tanh(c)
        return (h, c), None

    h0 = jnp.zeros((B, H), jnp.float32)
    c0 = jnp.zeros((B, H), jnp.float32)
    (h_n, _), _ = jax.lax.scan(step, (h0, c0), jnp.transpose(x, (1, 0, 2)))
    return h_n @ w_fc.T + b_fc


if __name__ == "__main__":
    # Module config: input_dim = encoding_dim = 128, hidden_dim = 64,
    # num_layers = 1, output_dim = number of unique emotion labels (pick 4).
    B, T, D, H, O = 2, 8, 128, 64, 4

    key = jax.random.PRNGKey(0)
    kx, k1, k2, k3, k4, k5, k6 = jax.random.split(key, 7)

    x = jax.random.normal(kx, (B, T, D), dtype=jnp.float32)

    scale = 0.1
    w_ih = scale * jax.random.normal(k1, (4 * H, D), dtype=jnp.float32)
    w_hh = scale * jax.random.normal(k2, (4 * H, H), dtype=jnp.float32)
    b_ih = scale * jax.random.normal(k3, (4 * H,), dtype=jnp.float32)
    b_hh = scale * jax.random.normal(k4, (4 * H,), dtype=jnp.float32)
    w_fc = scale * jax.random.normal(k5, (O, H), dtype=jnp.float32)
    b_fc = scale * jax.random.normal(k6, (O,), dtype=jnp.float32)

    # One-time weight packing (hoisted out of the per-call path).
    packed = jax.block_until_ready(
        pack_emotion_classifier_params(w_ih, w_hh, b_ih, b_hh, w_fc, b_fc))

    out = emotion_classifier_forward(x, packed, O)
    out = jax.block_until_ready(out)

    ref = _reference_forward(x, w_ih, w_hh, b_ih, b_hh, w_fc, b_fc)
    assert out.shape == (B, O)
    assert jnp.allclose(out, ref, atol=1e-4, rtol=1e-4)

    print("KERNEL_OK")
</pallas_src>

<mosaic_0001>
module attributes {stable_mosaic.version = 11 : i64} {
  func.func @_lstm_classifier_kernel(%arg0: memref<64x128xf32, #tpu.memory_space<vmem>>, %arg1: memref<136x512xf32, #tpu.memory_space<vmem>>, %arg2: memref<128x512xf32, #tpu.memory_space<any>>, %arg3: memref<136x128xf32, #tpu.memory_space<any>>, %arg4: memref<8x128xf32, #tpu.memory_space<vmem>>, %arg5: memref<64x512xf32, #tpu.memory_space<vmem>>, %arg6: memref<128x512xf32, #tpu.memory_space<vmem>>, %arg7: memref<136x128xf32, #tpu.memory_space<vmem>>, %arg8: memref<2x!tpu.dma_semaphore, #tpu.memory_space<semaphore_mem>>) attributes {dimension_semantics = [], scalar_prefetch = 0 : i64, scratch_operands = 4 : i64, tpu.core_type = #tpu.core_type<tc>} {
    %c0_i32 = arith.constant 0 : i32
    %0 = tpu.memref_slice %arg8[%c0_i32] : memref<2x!tpu.dma_semaphore, #tpu.memory_space<semaphore_mem>> -> memref<1x!tpu.dma_semaphore, #tpu.memory_space<semaphore_mem>>
    %1 = tpu.memref_squeeze %0 : memref<1x!tpu.dma_semaphore, #tpu.memory_space<semaphore_mem>> -> memref<!tpu.dma_semaphore, #tpu.memory_space<semaphore_mem>>
    tpu.enqueue_dma source(%arg2 : memref<128x512xf32, #tpu.memory_space<any>>) target(%arg6 : memref<128x512xf32, #tpu.memory_space<vmem>>) target_semaphore(%1 : memref<!tpu.dma_semaphore, #tpu.memory_space<semaphore_mem>>)
    %c1_i32 = arith.constant 1 : i32
    %2 = tpu.memref_slice %arg8[%c1_i32] : memref<2x!tpu.dma_semaphore, #tpu.memory_space<semaphore_mem>> -> memref<1x!tpu.dma_semaphore, #tpu.memory_space<semaphore_mem>>
    %3 = tpu.memref_squeeze %2 : memref<1x!tpu.dma_semaphore, #tpu.memory_space<semaphore_mem>> -> memref<!tpu.dma_semaphore, #tpu.memory_space<semaphore_mem>>
    tpu.enqueue_dma source(%arg3 : memref<136x128xf32, #tpu.memory_space<any>>) target(%arg7 : memref<136x128xf32, #tpu.memory_space<vmem>>) target_semaphore(%3 : memref<!tpu.dma_semaphore, #tpu.memory_space<semaphore_mem>>)
    %c0 = arith.constant 0 : index
    %c0_0 = arith.constant 0 : index
    %4 = vector.load %arg0[%c0, %c0_0] : memref<64x128xf32, #tpu.memory_space<vmem>>, vector<64x128xf32>
    %c0_1 = arith.constant 0 : index
    %c0_2 = arith.constant 0 : index
    %5 = vector.load %arg1[%c0_1, %c0_2] : memref<136x512xf32, #tpu.memory_space<vmem>>, vector<128x512xf32>
    %cst = arith.constant dense<0.000000e+00> : vector<64x512xf32>
    %6 = tpu.matmul %4, %5, %cst {dimension_numbers = #tpu.dot_dimension_numbers<[1], [0], [0], [1], [0, 0, 1, 1], [], []>} : vector<64x128xf32>, vector<128x512xf32>, vector<64x512xf32> -> vector<64x512xf32>
    %c128 = arith.constant 128 : index
    %c0_3 = arith.constant 0 : index
    %7 = vector.load %arg1[%c128, %c0_3] : memref<136x512xf32, #tpu.memory_space<vmem>>, vector<1x512xf32>
    %8 = vector.broadcast %7 : vector<1x512xf32> to vector<64x512xf32>
    %9 = arith.addf %6, %8 : vector<64x512xf32>
    %c0_4 = arith.constant 0 : index
    %c0_5 = arith.constant 0 : index
    %10 = vector.load %arg5[%c0_4, %c0_5] : memref<64x512xf32, #tpu.memory_space<vmem>>, vector<64x512xf32>
    tpu.vector_store %arg5[%c0_4, %c0_5], %9 {strides = array<i32>} : memref<64x512xf32, #tpu.memory_space<vmem>>, vector<64x512xf32>,
    %c0_i32_6 = arith.constant 0 : i32
    %11 = tpu.memref_slice %arg8[%c0_i32_6] : memref<2x!tpu.dma_semaphore, #tpu.memory_space<semaphore_mem>> -> memref<1x!tpu.dma_semaphore, #tpu.memory_space<semaphore_mem>>
    %12 = tpu.memref_squeeze %11 : memref<1x!tpu.dma_semaphore, #tpu.memory_space<semaphore_mem>> -> memref<!tpu.dma_semaphore, #tpu.memory_space<semaphore_mem>>
    tpu.wait_dma2 semaphore(%12 : memref<!tpu.dma_semaphore, #tpu.memory_space<semaphore_mem>>) src(%arg2 : memref<128x512xf32, #tpu.memory_space<any>>) dst(%arg6 : memref<128x512xf32, #tpu.memory_space<vmem>>)
    %c0_7 = arith.constant 0 : index
    %c0_8 = arith.constant 0 : index
    %13 = vector.load %arg6[%c0_7, %c0_8] : memref<128x512xf32, #tpu.memory_space<vmem>>, vector<128x512xf32>
    %cst_9 = arith.constant 0.000000e+00 : f32
    %14 = vector.broadcast %cst_9 : f32 to vector<8x128xf32>
    %cst_10 = arith.constant 0.000000e+00 : f32
    %15 = vector.broadcast %cst_10 : f32 to vector<8x128xf32>
    %c0_11 = arith.constant 0 : index
    %c0_12 = arith.constant 0 : index
    %16 = vector.load %arg5[%c0_11, %c0_12] : memref<64x512xf32, #tpu.memory_space<vmem>>, vector<8x512xf32>
    %cst_13 = arith.constant dense<0.000000e+00> : vector<8x512xf32>
    %17 = tpu.matmul %14, %13, %cst_13 {dimension_numbers = #tpu.dot_dimension_numbers<[1], [0], [0], [1], [0, 0, 1, 1], [], []>} : vector<8x128xf32>, vector<128x512xf32>, vector<8x512xf32> -> vector<8x512xf32>
    %18 = arith.addf %16, %17 : vector<8x512xf32>
    %19 = vector.extract_strided_slice %18 {offsets = [0, 0], sizes = [8, 128], strides = [1, 1]} : vector<8x512xf32> to vector<8x128xf32>
    %20 = arith.negf %19 : vector<8x128xf32>
    %21 = math.exp %20 : vector<8x128xf32>
    %cst_14 = arith.constant 1.000000e+00 : f32
    %22 = vector.broadcast %cst_14 : f32 to vector<8x128xf32>
    %23 = arith.addf %22, %21 : vector<8x128xf32>
    %24 = arith.divf %22, %23 : vector<8x128xf32>
    %25 = vector.extract_strided_slice %18 {offsets = [0, 128], sizes = [8, 128], strides = [1, 1]} : vector<8x512xf32> to vector<8x128xf32>
    %26 = arith.negf %25 : vector<8x128xf32>
    %27 = math.exp %26 : vector<8x128xf32>
    %cst_15 = arith.constant 1.000000e+00 : f32
    %28 = vector.broadcast %cst_15 : f32 to vector<8x128xf32>
    %29 = arith.addf %28, %27 : vector<8x128xf32>
    %30 = arith.divf %28, %29 : vector<8x128xf32>
    %31 = vector.extract_strided_slice %18 {offsets = [0, 256], sizes = [8, 128], strides = [1, 1]} : vector<8x512xf32> to vector<8x128xf32>
    %32 = math.tanh %31 : vector<8x128xf32>
    %33 = vector.extract_strided_slice %18 {offsets = [0, 384], sizes = [8, 128], strides = [1, 1]} : vector<8x512xf32> to vector<8x128xf32>
    %34 = arith.negf %33 : vector<8x128xf32>
    %35 = math.exp %34 : vector<8x128xf32>
    %cst_16 = arith.constant 1.000000e+00 : f32
    %36 = vector.broadcast %cst_16 : f32 to vector<8x128xf32>
    %37 = arith.addf %36, %35 : vector<8x128xf32>
    %38 = arith.divf %36, %37 : vector<8x128xf32>
    %39 = arith.mulf %30, %15 : vector<8x128xf32>
    %40 = arith.mulf %24, %32 : vector<8x128xf32>
    %41 = arith.addf %39, %40 : vector<8x128xf32>
    %42 = math.tanh %41 : vector<8x128xf32>
    %43 = arith.mulf %38, %42 : vector<8x128xf32>
    %c8 = arith.constant 8 : index
    %c0_17 = arith.constant 0 : index
    %44 = vector.load %arg5[%c8, %c0_17] : memref<64x512xf32, #tpu.memory_space<vmem>>, vector<8x512xf32>
    %cst_18 = arith.constant dense<0.000000e+00> : vector<8x512xf32>
    %45 = tpu.matmul %43, %13, %cst_18 {dimension_numbers = #tpu.dot_dimension_numbers<[1], [0], [0], [1], [0, 0, 1, 1], [], []>} : vector<8x128xf32>, vector<128x512xf32>, vector<8x512xf32> -> vector<8x512xf32>
    %46 = arith.addf %44, %45 : vector<8x512xf32>
    %47 = vector.extract_strided_slice %46 {offsets = [0, 0], sizes = [8, 128], strides = [1, 1]} : vector<8x512xf32> to vector<8x128xf32>
    %48 = arith.negf %47 : vector<8x128xf32>
    %49 = math.exp %48 : vector<8x128xf32>
    %cst_19 = arith.constant 1.000000e+00 : f32
    %50 = vector.broadcast %cst_19 : f32 to vector<8x128xf32>
    %51 = arith.addf %50, %49 : vector<8x128xf32>
    %52 = arith.divf %50, %51 : vector<8x128xf32>
    %53 = vector.extract_strided_slice %46 {offsets = [0, 128], sizes = [8, 128], strides = [1, 1]} : vector<8x512xf32> to vector<8x128xf32>
    %54 = arith.negf %53 : vector<8x128xf32>
    %55 = math.exp %54 : vector<8x128xf32>
    %cst_20 = arith.constant 1.000000e+00 : f32
    %56 = vector.broadcast %cst_20 : f32 to vector<8x128xf32>
    %57 = arith.addf %56, %55 : vector<8x128xf32>
    %58 = arith.divf %56, %57 : vector<8x128xf32>
    %59 = vector.extract_strided_slice %46 {offsets = [0, 256], sizes = [8, 128], strides = [1, 1]} : vector<8x512xf32> to vector<8x128xf32>
    %60 = math.tanh %59 : vector<8x128xf32>
    %61 = vector.extract_strided_slice %46 {offsets = [0, 384], sizes = [8, 128], strides = [1, 1]} : vector<8x512xf32> to vector<8x128xf32>
    %62 = arith.negf %61 : vector<8x128xf32>
    %63 = math.exp %62 : vector<8x128xf32>
    %cst_21 = arith.constant 1.000000e+00 : f32
    %64 = vector.broadcast %cst_21 : f32 to vector<8x128xf32>
    %65 = arith.addf %64, %63 : vector<8x128xf32>
    %66 = arith.divf %64, %65 : vector<8x128xf32>
    %67 = arith.mulf %58, %41 : vector<8x128xf32>
    %68 = arith.mulf %52, %60 : vector<8x128xf32>
    %69 = arith.addf %67, %68 : vector<8x128xf32>
    %70 = math.tanh %69 : vector<8x128xf32>
    %71 = arith.mulf %66, %70 : vector<8x128xf32>
    %c16 = arith.constant 16 : index
    %c0_22 = arith.constant 0 : index
    %72 = vector.load %arg5[%c16, %c0_22] : memref<64x512xf32, #tpu.memory_space<vmem>>, vector<8x512xf32>
    %cst_23 = arith.constant dense<0.000000e+00> : vector<8x512xf32>
    %73 = tpu.matmul %71, %13, %cst_23 {dimension_numbers = #tpu.dot_dimension_numbers<[1], [0], [0], [1], [0, 0, 1, 1], [], []>} : vector<8x128xf32>, vector<128x512xf32>, vector<8x512xf32> -> vector<8x512xf32>
    %74 = arith.addf %72, %73 : vector<8x512xf32>
    %75 = vector.extract_strided_slice %74 {offsets = [0, 0], sizes = [8, 128], strides = [1, 1]} : vector<8x512xf32> to vector<8x128xf32>
    %76 = arith.negf %75 : vector<8x128xf32>
    %77 = math.exp %76 : vector<8x128xf32>
    %cst_24 = arith.constant 1.000000e+00 : f32
    %78 = vector.broadcast %cst_24 : f32 to vector<8x128xf32>
    %79 = arith.addf %78, %77 : vector<8x128xf32>
    %80 = arith.divf %78, %79 : vector<8x128xf32>
    %81 = vector.extract_strided_slice %74 {offsets = [0, 128], sizes = [8, 128], strides = [1, 1]} : vector<8x512xf32> to vector<8x128xf32>
    %82 = arith.negf %81 : vector<8x128xf32>
    %83 = math.exp %82 : vector<8x128xf32>
    %cst_25 = arith.constant 1.000000e+00 : f32
    %84 = vector.broadcast %cst_25 : f32 to vector<8x128xf32>
    %85 = arith.addf %84, %83 : vector<8x128xf32>
    %86 = arith.divf %84, %85 : vector<8x128xf32>
    %87 = vector.extract_strided_slice %74 {offsets = [0, 256], sizes = [8, 128], strides = [1, 1]} : vector<8x512xf32> to vector<8x128xf32>
    %88 = math.tanh %87 : vector<8x128xf32>
    %89 = vector.extract_strided_slice %74 {offsets = [0, 384], sizes = [8, 128], strides = [1, 1]} : vector<8x512xf32> to vector<8x128xf32>
    %90 = arith.negf %89 : vector<8x128xf32>
    %91 = math.exp %90 : vector<8x128xf32>
    %cst_26 = arith.constant 1.000000e+00 : f32
    %92 = vector.broadcast %cst_26 : f32 to vector<8x128xf32>
    %93 = arith.addf %92, %91 : vector<8x128xf32>
    %94 = arith.divf %92, %93 : vector<8x128xf32>
    %95 = arith.mulf %86, %69 : vector<8x128xf32>
    %96 = arith.mulf %80, %88 : vector<8x128xf32>
    %97 = arith.addf %95, %96 : vector<8x128xf32>
    %98 = math.tanh %97 : vector<8x128xf32>
    %99 = arith.mulf %94, %98 : vector<8x128xf32>
    %c24 = arith.constant 24 : index
    %c0_27 = arith.constant 0 : index
    %100 = vector.load %arg5[%c24, %c0_27] : memref<64x512xf32, #tpu.memory_space<vmem>>, vector<8x512xf32>
    %cst_28 = arith.constant dense<0.000000e+00> : vector<8x512xf32>
    %101 = tpu.matmul %99, %13, %cst_28 {dimension_numbers = #tpu.dot_dimension_numbers<[1], [0], [0], [1], [0, 0, 1, 1], [], []>} : vector<8x128xf32>, vector<128x512xf32>, vector<8x512xf32> -> vector<8x512xf32>
    %102 = arith.addf %100, %101 : vector<8x512xf32>
    %103 = vector.extract_strided_slice %102 {offsets = [0, 0], sizes = [8, 128], strides = [1, 1]} : vector<8x512xf32> to vector<8x128xf32>
    %104 = arith.negf %103 : vector<8x128xf32>
    %105 = math.exp %104 : vector<8x128xf32>
    %cst_29 = arith.constant 1.000000e+00 : f32
    %106 = vector.broadcast %cst_29 : f32 to vector<8x128xf32>
    %107 = arith.addf %106, %105 : vector<8x128xf32>
    %108 = arith.divf %106, %107 : vector<8x128xf32>
    %109 = vector.extract_strided_slice %102 {offsets = [0, 128], sizes = [8, 128], strides = [1, 1]} : vector<8x512xf32> to vector<8x128xf32>
    %110 = arith.negf %109 : vector<8x128xf32>
    %111 = math.exp %110 : vector<8x128xf32>
    %cst_30 = arith.constant 1.000000e+00 : f32
    %112 = vector.broadcast %cst_30 : f32 to vector<8x128xf32>
    %113 = arith.addf %112, %111 : vector<8x128xf32>
    %114 = arith.divf %112, %113 : vector<8x128xf32>
    %115 = vector.extract_strided_slice %102 {offsets = [0, 256], sizes = [8, 128], strides = [1, 1]} : vector<8x512xf32> to vector<8x128xf32>
    %116 = math.tanh %115 : vector<8x128xf32>
    %117 = vector.extract_strided_slice %102 {offsets = [0, 384], sizes = [8, 128], strides = [1, 1]} : vector<8x512xf32> to vector<8x128xf32>
    %118 = arith.negf %117 : vector<8x128xf32>
    %119 = math.exp %118 : vector<8x128xf32>
    %cst_31 = arith.constant 1.000000e+00 : f32
    %120 = vector.broadcast %cst_31 : f32 to vector<8x128xf32>
    %121 = arith.addf %120, %119 : vector<8x128xf32>
    %122 = arith.divf %120, %121 : vector<8x128xf32>
    %123 = arith.mulf %114, %97 : vector<8x128xf32>
    %124 = arith.mulf %108, %116 : vector<8x128xf32>
    %125 = arith.addf %123, %124 : vector<8x128xf32>
    %126 = math.tanh %125 : vector<8x128xf32>
    %127 = arith.mulf %122, %126 : vector<8x128xf32>
    %c32 = arith.constant 32 : index
    %c0_32 = arith.constant 0 : index
    %128 = vector.load %arg5[%c32, %c0_32] : memref<64x512xf32, #tpu.memory_space<vmem>>, vector<8x512xf32>
    %cst_33 = arith.constant dense<0.000000e+00> : vector<8x512xf32>
    %129 = tpu.matmul %127, %13, %cst_33 {dimension_numbers = #tpu.dot_dimension_numbers<[1], [0], [0], [1], [0, 0, 1, 1], [], []>} : vector<8x128xf32>, vector<128x512xf32>, vector<8x512xf32> -> vector<8x512xf32>
    %130 = arith.addf %128, %129 : vector<8x512xf32>
    %131 = vector.extract_strided_slice %130 {offsets = [0, 0], sizes = [8, 128], strides = [1, 1]} : vector<8x512xf32> to vector<8x128xf32>
    %132 = arith.negf %131 : vector<8x128xf32>
    %133 = math.exp %132 : vector<8x128xf32>
    %cst_34 = arith.constant 1.000000e+00 : f32
    %134 = vector.broadcast %cst_34 : f32 to vector<8x128xf32>
    %135 = arith.addf %134, %133 : vector<8x128xf32>
    %136 = arith.divf %134, %135 : vector<8x128xf32>
    %137 = vector.extract_strided_slice %130 {offsets = [0, 128], sizes = [8, 128], strides = [1, 1]} : vector<8x512xf32> to vector<8x128xf32>
    %138 = arith.negf %137 : vector<8x128xf32>
    %139 = math.exp %138 : vector<8x128xf32>
    %cst_35 = arith.constant 1.000000e+00 : f32
    %140 = vector.broadcast %cst_35 : f32 to vector<8x128xf32>
    %141 = arith.addf %140, %139 : vector<8x128xf32>
    %142 = arith.divf %140, %141 : vector<8x128xf32>
    %143 = vector.extract_strided_slice %130 {offsets = [0, 256], sizes = [8, 128], strides = [1, 1]} : vector<8x512xf32> to vector<8x128xf32>
    %144 = math.tanh %143 : vector<8x128xf32>
    %145 = vector.extract_strided_slice %130 {offsets = [0, 384], sizes = [8, 128], strides = [1, 1]} : vector<8x512xf32> to vector<8x128xf32>
    %146 = arith.negf %145 : vector<8x128xf32>
    %147 = math.exp %146 : vector<8x128xf32>
    %cst_36 = arith.constant 1.000000e+00 : f32
    %148 = vector.broadcast %cst_36 : f32 to vector<8x128xf32>
    %149 = arith.addf %148, %147 : vector<8x128xf32>
    %150 = arith.divf %148, %149 : vector<8x128xf32>
    %151 = arith.mulf %142, %125 : vector<8x128xf32>
    %152 = arith.mulf %136, %144 : vector<8x128xf32>
    %153 = arith.addf %151, %152 : vector<8x128xf32>
    %154 = math.tanh %153 : vector<8x128xf32>
    %155 = arith.mulf %150, %154 : vector<8x128xf32>
    %c40 = arith.constant 40 : index
    %c0_37 = arith.constant 0 : index
    %156 = vector.load %arg5[%c40, %c0_37] : memref<64x512xf32, #tpu.memory_space<vmem>>, vector<8x512xf32>
    %cst_38 = arith.constant dense<0.000000e+00> : vector<8x512xf32>
    %157 = tpu.matmul %155, %13, %cst_38 {dimension_numbers = #tpu.dot_dimension_numbers<[1], [0], [0], [1], [0, 0, 1, 1], [], []>} : vector<8x128xf32>, vector<128x512xf32>, vector<8x512xf32> -> vector<8x512xf32>
    %158 = arith.addf %156, %157 : vector<8x512xf32>
    %159 = vector.extract_strided_slice %158 {offsets = [0, 0], sizes = [8, 128], strides = [1, 1]} : vector<8x512xf32> to vector<8x128xf32>
    %160 = arith.negf %159 : vector<8x128xf32>
    %161 = math.exp %160 : vector<8x128xf32>
    %cst_39 = arith.constant 1.000000e+00 : f32
    %162 = vector.broadcast %cst_39 : f32 to vector<8x128xf32>
    %163 = arith.addf %162, %161 : vector<8x128xf32>
    %164 = arith.divf %162, %163 : vector<8x128xf32>
    %165 = vector.extract_strided_slice %158 {offsets = [0, 128], sizes = [8, 128], strides = [1, 1]} : vector<8x512xf32> to vector<8x128xf32>
    %166 = arith.negf %165 : vector<8x128xf32>
    %167 = math.exp %166 : vector<8x128xf32>
    %cst_40 = arith.constant 1.000000e+00 : f32
    %168 = vector.broadcast %cst_40 : f32 to vector<8x128xf32>
    %169 = arith.addf %168, %167 : vector<8x128xf32>
    %170 = arith.divf %168, %169 : vector<8x128xf32>
    %171 = vector.extract_strided_slice %158 {offsets = [0, 256], sizes = [8, 128], strides = [1, 1]} : vector<8x512xf32> to vector<8x128xf32>
    %172 = math.tanh %171 : vector<8x128xf32>
    %173 = vector.extract_strided_slice %158 {offsets = [0, 384], sizes = [8, 128], strides = [1, 1]} : vector<8x512xf32> to vector<8x128xf32>
    %174 = arith.negf %173 : vector<8x128xf32>
    %175 = math.exp %174 : vector<8x128xf32>
    %cst_41 = arith.constant 1.000000e+00 : f32
    %176 = vector.broadcast %cst_41 : f32 to vector<8x128xf32>
    %177 = arith.addf %176, %175 : vector<8x128xf32>
    %178 = arith.divf %176, %177 : vector<8x128xf32>
    %179 = arith.mulf %170, %153 : vector<8x128xf32>
    %180 = arith.mulf %164, %172 : vector<8x128xf32>
    %181 = arith.addf %179, %180 : vector<8x128xf32>
    %182 = math.tanh %181 : vector<8x128xf32>
    %183 = arith.mulf %178, %182 : vector<8x128xf32>
    %c48 = arith.constant 48 : index
    %c0_42 = arith.constant 0 : index
    %184 = vector.load %arg5[%c48, %c0_42] : memref<64x512xf32, #tpu.memory_space<vmem>>, vector<8x512xf32>
    %cst_43 = arith.constant dense<0.000000e+00> : vector<8x512xf32>
    %185 = tpu.matmul %183, %13, %cst_43 {dimension_numbers = #tpu.dot_dimension_numbers<[1], [0], [0], [1], [0, 0, 1, 1], [], []>} : vector<8x128xf32>, vector<128x512xf32>, vector<8x512xf32> -> vector<8x512xf32>
    %186 = arith.addf %184, %185 : vector<8x512xf32>
    %187 = vector.extract_strided_slice %186 {offsets = [0, 0], sizes = [8, 128], strides = [1, 1]} : vector<8x512xf32> to vector<8x128xf32>
    %188 = arith.negf %187 : vector<8x128xf32>
    %189 = math.exp %188 : vector<8x128xf32>
    %cst_44 = arith.constant 1.000000e+00 : f32
    %190 = vector.broadcast %cst_44 : f32 to vector<8x128xf32>
    %191 = arith.addf %190, %189 : vector<8x128xf32>
    %192 = arith.divf %190, %191 : vector<8x128xf32>
    %193 = vector.extract_strided_slice %186 {offsets = [0, 128], sizes = [8, 128], strides = [1, 1]} : vector<8x512xf32> to vector<8x128xf32>
    %194 = arith.negf %193 : vector<8x128xf32>
    %195 = math.exp %194 : vector<8x128xf32>
    %cst_45 = arith.constant 1.000000e+00 : f32
    %196 = vector.broadcast %cst_45 : f32 to vector<8x128xf32>
    %197 = arith.addf %196, %195 : vector<8x128xf32>
    %198 = arith.divf %196, %197 : vector<8x128xf32>
    %199 = vector.extract_strided_slice %186 {offsets = [0, 256], sizes = [8, 128], strides = [1, 1]} : vector<8x512xf32> to vector<8x128xf32>
    %200 = math.tanh %199 : vector<8x128xf32>
    %201 = vector.extract_strided_slice %186 {offsets = [0, 384], sizes = [8, 128], strides = [1, 1]} : vector<8x512xf32> to vector<8x128xf32>
    %202 = arith.negf %201 : vector<8x128xf32>
    %203 = math.exp %202 : vector<8x128xf32>
    %cst_46 = arith.constant 1.000000e+00 : f32
    %204 = vector.broadcast %cst_46 : f32 to vector<8x128xf32>
    %205 = arith.addf %204, %203 : vector<8x128xf32>
    %206 = arith.divf %204, %205 : vector<8x128xf32>
    %207 = arith.mulf %198, %181 : vector<8x128xf32>
    %208 = arith.mulf %192, %200 : vector<8x128xf32>
    %209 = arith.addf %207, %208 : vector<8x128xf32>
    %210 = math.tanh %209 : vector<8x128xf32>
    %211 = arith.mulf %206, %210 : vector<8x128xf32>
    %c56 = arith.constant 56 : index
    %c0_47 = arith.constant 0 : index
    %212 = vector.load %arg5[%c56, %c0_47] : memref<64x512xf32, #tpu.memory_space<vmem>>, vector<8x512xf32>
    %cst_48 = arith.constant dense<0.000000e+00> : vector<8x512xf32>
    %213 = tpu.matmul %211, %13, %cst_48 {dimension_numbers = #tpu.dot_dimension_numbers<[1], [0], [0], [1], [0, 0, 1, 1], [], []>} : vector<8x128xf32>, vector<128x512xf32>, vector<8x512xf32> -> vector<8x512xf32>
    %214 = arith.addf %212, %213 : vector<8x512xf32>
    %215 = vector.extract_strided_slice %214 {offsets = [0, 0], sizes = [8, 128], strides = [1, 1]} : vector<8x512xf32> to vector<8x128xf32>
    %216 = arith.negf %215 : vector<8x128xf32>
    %217 = math.exp %216 : vector<8x128xf32>
    %cst_49 = arith.constant 1.000000e+00 : f32
    %218 = vector.broadcast %cst_49 : f32 to vector<8x128xf32>
    %219 = arith.addf %218, %217 : vector<8x128xf32>
    %220 = arith.divf %218, %219 : vector<8x128xf32>
    %221 = vector.extract_strided_slice %214 {offsets = [0, 128], sizes = [8, 128], strides = [1, 1]} : vector<8x512xf32> to vector<8x128xf32>
    %222 = arith.negf %221 : vector<8x128xf32>
    %223 = math.exp %222 : vector<8x128xf32>
    %cst_50 = arith.constant 1.000000e+00 : f32
    %224 = vector.broadcast %cst_50 : f32 to vector<8x128xf32>
    %225 = arith.addf %224, %223 : vector<8x128xf32>
    %226 = arith.divf %224, %225 : vector<8x128xf32>
    %227 = vector.extract_strided_slice %214 {offsets = [0, 256], sizes = [8, 128], strides = [1, 1]} : vector<8x512xf32> to vector<8x128xf32>
    %228 = math.tanh %227 : vector<8x128xf32>
    %229 = vector.extract_strided_slice %214 {offsets = [0, 384], sizes = [8, 128], strides = [1, 1]} : vector<8x512xf32> to vector<8x128xf32>
    %230 = arith.negf %229 : vector<8x128xf32>
    %231 = math.exp %230 : vector<8x128xf32>
    %cst_51 = arith.constant 1.000000e+00 : f32
    %232 = vector.broadcast %cst_51 : f32 to vector<8x128xf32>
    %233 = arith.addf %232, %231 : vector<8x128xf32>
    %234 = arith.divf %232, %233 : vector<8x128xf32>
    %235 = arith.mulf %226, %209 : vector<8x128xf32>
    %236 = arith.mulf %220, %228 : vector<8x128xf32>
    %237 = arith.addf %235, %236 : vector<8x128xf32>
    %238 = math.tanh %237 : vector<8x128xf32>
    %239 = arith.mulf %234, %238 : vector<8x128xf32>
    %c1_i32_52 = arith.constant 1 : i32
    %240 = tpu.memref_slice %arg8[%c1_i32_52] : memref<2x!tpu.dma_semaphore, #tpu.memory_space<semaphore_mem>> -> memref<1x!tpu.dma_semaphore, #tpu.memory_space<semaphore_mem>>
    %241 = tpu.memref_squeeze %240 : memref<1x!tpu.dma_semaphore, #tpu.memory_space<semaphore_mem>> -> memref<!tpu.dma_semaphore, #tpu.memory_space<semaphore_mem>>
    tpu.wait_dma2 semaphore(%241 : memref<!tpu.dma_semaphore, #tpu.memory_space<semaphore_mem>>) src(%arg3 : memref<136x128xf32, #tpu.memory_space<any>>) dst(%arg7 : memref<136x128xf32, #tpu.memory_space<vmem>>)
    %c0_53 = arith.constant 0 : index
    %c0_54 = arith.constant 0 : index
    %242 = vector.load %arg7[%c0_53, %c0_54] : memref<136x128xf32, #tpu.memory_space<vmem>>, vector<128x128xf32>
    %cst_55 = arith.constant dense<0.000000e+00> : vector<8x128xf32>
    %243 = tpu.matmul %239, %242, %cst_55 {dimension_numbers = #tpu.dot_dimension_numbers<[1], [0], [0], [1], [0, 0, 1, 1], [], []>} : vector<8x128xf32>, vector<128x128xf32>, vector<8x128xf32> -> vector<8x128xf32>
    %c128_56 = arith.constant 128 : index
    %c0_57 = arith.constant 0 : index
    %244 = vector.load %arg7[%c128_56, %c0_57] : memref<136x128xf32, #tpu.memory_space<vmem>>, vector<1x128xf32>
    %245 = vector.broadcast %244 : vector<1x128xf32> to vector<8x128xf32>
    %246 = arith.addf %243, %245 : vector<8x128xf32>
    %c0_58 = arith.constant 0 : index
    %c0_59 = arith.constant 0 : index
    %247 = vector.load %arg4[%c0_58, %c0_59] : memref<8x128xf32, #tpu.memory_space<vmem>>, vector<8x128xf32>
    tpu.vector_store %arg4[%c0_58, %c0_59], %246 {strides = array<i32>} : memref<8x128xf32, #tpu.memory_space<vmem>>, vector<8x128xf32>,
    return
  }
}

</mosaic_0001>

<llo_original>
// kernel: emotion_classifier_forward.1
$region0: #{emotion_classifier_forward.1}
  #allocation0 [shape = 'u32[]', space=smem, size = 0x4, offset = 0x4, fixed_abs, tag = 'smem constant byte address 0x4 - core index']
  #allocation1 [shape = 'u32[72,128]{1,0:T(1,128)}', space=vmem, size = 0x9000, scoped, tag = 'internal scratch']
  #allocation2 [shape = 'f32[64,512]{1,0:T(8,128)}', space=vmem, size = 0x20000, scoped, tag = 'scratch operand']
  #allocation3 [shape = 'f32[128,512]{1,0:T(8,128)}', space=vmem, size = 0x40000, scoped, tag = 'scratch operand']
  #allocation4 [shape = 'f32[136,128]{1,0:T(8,128)}', space=vmem, size = 0x11000, scoped, tag = 'scratch operand']
  #allocation5 [shape = 's32[2]{0}', space=sflag, size = 0x8, scoped, tag = 'scratch operand']
  #allocation8 [shape = 's32[]', space=sflag, size = 0x4, offset = 0, fixed_abs, tag = 'sflag constant byte address 0x0 - dummy sync flag']
  #allocation9 [shape = 's32[]', space=sflag, size = 0x4, offset = 0, fixed_abs, tag = 'sflag constant byte address 0x0 - dummy sync flag']
  #allocation10 [shape = 'u32[]', space=smem, size = 0x4, offset = 0x44, fixed_abs, tag = 'smem constant byte address 0x44 - assertion arg 0']
  #allocation11 [shape = 'u32[]', space=smem, size = 0x4, offset = 0x48, fixed_abs, tag = 'smem constant byte address 0x48 - assertion arg 1']
  #allocation12 [shape = 's32[]', space=sflag, size = 0x4, offset = 0, fixed_abs, tag = 'sflag constant byte address 0x0 - dummy sync flag']
  #allocation13 [shape = 's32[]', space=sflag, size = 0x4, offset = 0, fixed_abs, tag = 'sflag constant byte address 0x0 - dummy sync flag']
  %s0 = inlined_call_operand.vmem [shape: f32[64,128], index: 0, kind: input, shape index: {}]
  %s1 = inlined_call_operand.hbm [shape: f32[136,512], index: 1, kind: input, shape index: {}]
  %s2 = inlined_call_operand.hbm [shape: f32[128,512], index: 2, kind: input, shape index: {}]
  %s3 = inlined_call_operand.hbm [shape: f32[136,128], index: 3, kind: input, shape index: {}]
  %s4 = inlined_call_operand.vmem [shape: f32[8,128], index: 4, kind: output, shape index: {}]
  %s5 = sld [smem:[#allocation0]]
  $region30: #{emotion_classifier_forward.1} parent=0
    _
  %s7 = ssub.s32 1, %s5
  %s8 = scalar_select 0, %s7, %s5
  $region1: #{emotion_classifier_forward.1} parent=0
    #allocation6 [shape = 'u8[278528]{0}', space=vmem, size = 0x44000, scoped, tag = 'input window, operand 1, single buffered']
    #allocation7 [shape = 's32[1]{0}', space=sflag, size = 0x4, scoped, tag = 'scoped memory for emotion_classifier_forward.1']
    %9 = vsyncpa [#allocation7], 0
    // Predicated region
    $region2: #{emotion_classifier_forward.1} parent=1 // pred_check
      _
    $region3: #{emotion_classifier_forward.1} parent=1 // pred_check_branch
      %11 = sbr.rel (0) target = $region5
    $region4: #{emotion_classifier_forward.1} parent=1 // pred_region
      _
    $region5: #{emotion_classifier_forward.1} parent=1 // pred_fallthru
      _
    // Predicated region
    $region6: #{emotion_classifier_forward.1} parent=1 // pred_check
      _
    $region7: #{emotion_classifier_forward.1} parent=1 // pred_check_branch
      %13 = sbr.rel (0) target = $region9
    $region8: #{emotion_classifier_forward.1} parent=1 // pred_region
      %15 = vsyncadd [#allocation7], 0
      %s16 = sshll.u32 %s1, 4
      %s17 = int_to_ptr.hbm [resolvable:$true] %s16
      %s18 = sshll.u32 [#allocation6], 4
      %s19 = int_to_ptr.vmem [resolvable:$true] %s18
      %24 = dma.hbm_to_vmem [thread:$0]  %s17, 8704, %s19, [#allocation7], 512, 512, 32
    $region9: #{emotion_classifier_forward.1} parent=1 // pred_fallthru
      _
    // Predicated region
    $region10: #{emotion_classifier_forward.1} parent=1 // pred_check
      _
    $region11: #{emotion_classifier_forward.1} parent=1 // pred_check_branch
      %26 = sbr.rel (0) target = $region13
    $region12: #{emotion_classifier_forward.1} parent=1 // pred_region
      %28 = dma.done [#allocation7], 8704
    $region13: #{emotion_classifier_forward.1} parent=1 // pred_fallthru
      _
    // Predicated region
    $region14: #{emotion_classifier_forward.1} parent=1 // pred_check
      _
    $region15: #{emotion_classifier_forward.1} parent=1 // pred_check_branch
      %30 = sbr.rel target = $region17
    $region16: #{emotion_classifier_forward.1} parent=1 // pred_region
      %31 = sst [smem:[#allocation10]] [#allocation9]
      %32 = sst [smem:[#allocation11]] [#allocation8]
    $region17: #{emotion_classifier_forward.1} parent=1 // pred_fallthru
      _
    %34 = shalt.err (0)
    %s36 = sshll.u32 %s2, 4
    %s37 = int_to_ptr.hbm [resolvable:$true] %s36
    %s38 = sshll.u32 [#allocation3], 4
    %s39 = int_to_ptr.vmem [resolvable:$true] %s38
    %41 = dma.hbm_to_vmem [thread:$0]  %s37, 8192, %s39, [#allocation5]
    %s42 = scalar_lea.sflag [#allocation5], 1
    // Predicated region
    $region18: #{emotion_classifier_forward.1} parent=1 // pred_check
      _
    $region19: #{emotion_classifier_forward.1} parent=1 // pred_check_branch
      %44 = sbr.rel target = $region21
    $region20: #{emotion_classifier_forward.1} parent=1 // pred_region
      %45 = sst [smem:[#allocation10]] [#allocation13]
      %46 = sst [smem:[#allocation11]] [#allocation12]
    $region21: #{emotion_classifier_forward.1} parent=1 // pred_fallthru
      _
    %48 = shalt.err (0)
    %s50 = sshll.u32 %s3, 4
    %s51 = int_to_ptr.hbm [resolvable:$true] %s50
    %s52 = sshll.u32 [#allocation4], 4
    %s53 = int_to_ptr.vmem [resolvable:$true] %s52
    %55 = dma.hbm_to_vmem [thread:$0]  %s51, 2176, %s53, %s42
    %v56 = vld [vmem:[%s0] sm:$0xff]
    %v57 = vld [vmem:[%s0 + $0x8] sm:$0xff]
    %v58 = vld [vmem:[%s0 + $0x10] sm:$0xff]
    %v59 = vld [vmem:[%s0 + $0x18] sm:$0xff]
    %v60 = vld [vmem:[%s0 + $0x20] sm:$0xff]
    %v61 = vld [vmem:[%s0 + $0x28] sm:$0xff]
    %v62 = vld [vmem:[%s0 + $0x30] sm:$0xff]
    %v63 = vld [vmem:[%s0 + $0x38] sm:$0xff]
    %v64 = vld [vmem:[#allocation6] sm:$0xff]
    %v65 = vld [vmem:[#allocation6 + $0x8] sm:$0xff]
    %v66 = vld [vmem:[#allocation6 + $0x10] sm:$0xff]
    %v67 = vld [vmem:[#allocation6 + $0x18] sm:$0xff]
    %v68 = vld [vmem:[#allocation6 + $0x20] sm:$0xff]
    %v69 = vld [vmem:[#allocation6 + $0x28] sm:$0xff]
    %v70 = vld [vmem:[#allocation6 + $0x30] sm:$0xff]
    %v71 = vld [vmem:[#allocation6 + $0x38] sm:$0xff]
    %v72 = vld [vmem:[#allocation6 + $0x40] sm:$0xff]
    %v73 = vld [vmem:[#allocation6 + $0x48] sm:$0xff]
    %v74 = vld [vmem:[#allocation6 + $0x50] sm:$0xff]
    %v75 = vld [vmem:[#allocation6 + $0x58] sm:$0xff]
    %v76 = vld [vmem:[#allocation6 + $0x60] sm:$0xff]
    %v77 = vld [vmem:[#allocation6 + $0x68] sm:$0xff]
    %v78 = vld [vmem:[#allocation6 + $0x70] sm:$0xff]
    %v79 = vld [vmem:[#allocation6 + $0x78] sm:$0xff]
    %v80 = vld [vmem:[#allocation6 + $0x80] sm:$0xff]
    %v81 = vld [vmem:[#allocation6 + $0x88] sm:$0xff]
    %v82 = vld [vmem:[#allocation6 + $0x90] sm:$0xff]
    %v83 = vld [vmem:[#allocation6 + $0x98] sm:$0xff]
    %v84 = vld [vmem:[#allocation6 + $0xa0] sm:$0xff]
    %v85 = vld [vmem:[#allocation6 + $0xa8] sm:$0xff]
    %v86 = vld [vmem:[#allocation6 + $0xb0] sm:$0xff]
    %v87 = vld [vmem:[#allocation6 + $0xb8] sm:$0xff]
    %v88 = vld [vmem:[#allocation6 + $0xc0] sm:$0xff]
    %v89 = vld [vmem:[#allocation6 + $0xc8] sm:$0xff]
    %v90 = vld [vmem:[#allocation6 + $0xd0] sm:$0xff]
    %v91 = vld [vmem:[#allocation6 + $0xd8] sm:$0xff]
    %v92 = vld [vmem:[#allocation6 + $0xe0] sm:$0xff]
    %v93 = vld [vmem:[#allocation6 + $0xe8] sm:$0xff]
    %v94 = vld [vmem:[#allocation6 + $0xf0] sm:$0xff]
    %v95 = vld [vmem:[#allocation6 + $0xf8] sm:$0xff]
    %v96 = vld [vmem:[#allocation6 + $0x100] sm:$0xff]
    %v97 = vld [vmem:[#allocation6 + $0x108] sm:$0xff]
    %v98 = vld [vmem:[#allocation6 + $0x110] sm:$0xff]
    %v99 = vld [vmem:[#allocation6 + $0x118] sm:$0xff]
    %v100 = vld [vmem:[#allocation6 + $0x120] sm:$0xff]
    %v101 = vld [vmem:[#allocation6 + $0x128] sm:$0xff]
    %v102 = vld [vmem:[#allocation6 + $0x130] sm:$0xff]
    %v103 = vld [vmem:[#allocation6 + $0x138] sm:$0xff]
    %v104 = vld [vmem:[#allocation6 + $0x140] sm:$0xff]
    %v105 = vld [vmem:[#allocation6 + $0x148] sm:$0xff]
    %v106 = vld [vmem:[#allocation6 + $0x150] sm:$0xff]
    %v107 = vld [vmem:[#allocation6 + $0x158] sm:$0xff]
    %v108 = vld [vmem:[#allocation6 + $0x160] sm:$0xff]
    %v109 = vld [vmem:[#allocation6 + $0x168] sm:$0xff]
    %v110 = vld [vmem:[#allocation6 + $0x170] sm:$0xff]
    %v111 = vld [vmem:[#allocation6 + $0x178] sm:$0xff]
    %v112 = vld [vmem:[#allocation6 + $0x180] sm:$0xff]
    %v113 = vld [vmem:[#allocation6 + $0x188] sm:$0xff]
    %v114 = vld [vmem:[#allocation6 + $0x190] sm:$0xff]
    %v115 = vld [vmem:[#allocation6 + $0x198] sm:$0xff]
    %v116 = vld [vmem:[#allocation6 + $0x1a0] sm:$0xff]
    %v117 = vld [vmem:[#allocation6 + $0x1a8] sm:$0xff]
    %v118 = vld [vmem:[#allocation6 + $0x1b0] sm:$0xff]
    %v119 = vld [vmem:[#allocation6 + $0x1b8] sm:$0xff]
    %v120 = vld [vmem:[#allocation6 + $0x1c0] sm:$0xff]
    %v121 = vld [vmem:[#allocation6 + $0x1c8] sm:$0xff]
    %v122 = vld [vmem:[#allocation6 + $0x1d0] sm:$0xff]
    %v123 = vld [vmem:[#allocation6 + $0x1d8] sm:$0xff]
    %v124 = vld [vmem:[#allocation6 + $0x1e0] sm:$0xff]
    %v125 = vld [vmem:[#allocation6 + $0x1e8] sm:$0xff]
    %v126 = vld [vmem:[#allocation6 + $0x1f0] sm:$0xff]
    %v127 = vld [vmem:[#allocation6 + $0x1f8] sm:$0xff]
    %s128 = scalar_lea.vmem [#allocation6], 512
    %v129 = vld [vmem:[%s128] ss:$8 sm:$0xf]
    %v131 = vperm.slane %v129, 0
    %v132 = vperm.slane %v129, 1
    %v133 = vperm.slane %v129, 2
    %v134 = vperm.slane %v129, 3
    %139 = vmatpush.msra.mxu0 %v124
    %140 = vmatpush.msra.mxu0 %v120
    %141 = vmatpush.msra.mxu0 %v116
    %142 = vmatpush.msra.mxu0 %v112
    %143 = vmatpush.msra.mxu0 %v108
    %144 = vmatpush.msra.mxu0 %v104
    %145 = vmatpush.msra.mxu0 %v100
    %146 = vmatpush.msra.mxu0 %v96
    %147 = vmatpush.msra.mxu0 %v92
    %148 = vmatpush.msra.mxu0 %v88
    %149 = vmatpush.msra.mxu0 %v84
    %150 = vmatpush.msra.mxu0 %v80
    %151 = vmatpush.msra.mxu0 %v76
    %152 = vmatpush.msra.mxu0 %v72
    %153 = vmatpush.msra.mxu0 %v68
    %154 = vmatpush.msra.mxu0 %v64
    %155 = vmatmul.f32.gmra.mxu0 %v56
    %v156 = vpop.f32.mrf.mxu0
    %v157 = vadd.f32 %v131, %v156
    %158 = vmatmul.f32.gmra.mxu0 %v57
    %v159 = vpop.f32.mrf.mxu0
    %v160 = vadd.f32 %v131, %v159
    %161 = vmatmul.f32.gmra.mxu0 %v58
    %v162 = vpop.f32.mrf.mxu0
    %v163 = vadd.f32 %v131, %v162
    %164 = vmatmul.f32.gmra.mxu0 %v59
    %v165 = vpop.f32.mrf.mxu0
    %v166 = vadd.f32 %v131, %v165
    %167 = vmatmul.f32.gmra.mxu0 %v60
    %v168 = vpop.f32.mrf.mxu0
    %v169 = vadd.f32 %v131, %v168
    %170 = vmatmul.f32.gmra.mxu0 %v61
    %v171 = vpop.f32.mrf.mxu0
    %v172 = vadd.f32 %v131, %v171
    %173 = vmatmul.f32.gmra.mxu0 %v62
    %v174 = vpop.f32.mrf.mxu0
    %v175 = vadd.f32 %v131, %v174
    %176 = vmatmul.f32.gmra.mxu0 %v63
    %v177 = vpop.f32.mrf.mxu0
    %v178 = vadd.f32 %v131, %v177
    %179 = vdwg.mxu0
    %180 = vmatpush.msra.mxu0 %v125
    %181 = vmatpush.msra.mxu0 %v121
    %182 = vmatpush.msra.mxu0 %v117
    %183 = vmatpush.msra.mxu0 %v113
    %184 = vmatpush.msra.mxu0 %v109
    %185 = vmatpush.msra.mxu0 %v105
    %186 = vmatpush.msra.mxu0 %v101
    %187 = vmatpush.msra.mxu0 %v97
    %188 = vmatpush.msra.mxu0 %v93
    %189 = vmatpush.msra.mxu0 %v89
    %190 = vmatpush.msra.mxu0 %v85
    %191 = vmatpush.msra.mxu0 %v81
    %192 = vmatpush.msra.mxu0 %v77
    %193 = vmatpush.msra.mxu0 %v73
    %194 = vmatpush.msra.mxu0 %v69
    %195 = vmatpush.msra.mxu0 %v65
    %196 = vmatmul.f32.gmra.mxu0 %v56
    %v197 = vpop.f32.mrf.mxu0
    %v198 = vadd.f32 %v132, %v197
    %199 = vmatmul.f32.gmra.mxu0 %v57
    %v200 = vpop.f32.mrf.mxu0
    %v201 = vadd.f32 %v132, %v200
    %202 = vmatmul.f32.gmra.mxu0 %v58
    %v203 = vpop.f32.mrf.mxu0
    %v204 = vadd.f32 %v132, %v203
    %205 = vmatmul.f32.gmra.mxu0 %v59
    %v206 = vpop.f32.mrf.mxu0
    %v207 = vadd.f32 %v132, %v206
    %208 = vmatmul.f32.gmra.mxu0 %v60
    %v209 = vpop.f32.mrf.mxu0
    %v210 = vadd.f32 %v132, %v209
    %211 = vmatmul.f32.gmra.mxu0 %v61
    %v212 = vpop.f32.mrf.mxu0
    %v213 = vadd.f32 %v132, %v212
    %214 = vmatmul.f32.gmra.mxu0 %v62
    %v215 = vpop.f32.mrf.mxu0
    %v216 = vadd.f32 %v132, %v215
    %217 = vmatmul.f32.gmra.mxu0 %v63
    %v218 = vpop.f32.mrf.mxu0
    %v219 = vadd.f32 %v132, %v218
    %220 = vdwg.mxu0
    %221 = vmatpush.msra.mxu0 %v126
    %222 = vmatpush.msra.mxu0 %v122
    %223 = vmatpush.msra.mxu0 %v118
    %224 = vmatpush.msra.mxu0 %v114
    %225 = vmatpush.msra.mxu0 %v110
    %226 = vmatpush.msra.mxu0 %v106
    %227 = vmatpush.msra.mxu0 %v102
    %228 = vmatpush.msra.mxu0 %v98
    %229 = vmatpush.msra.mxu0 %v94
    %230 = vmatpush.msra.mxu0 %v90
    %231 = vmatpush.msra.mxu0 %v86
    %232 = vmatpush.msra.mxu0 %v82
    %233 = vmatpush.msra.mxu0 %v78
    %234 = vmatpush.msra.mxu0 %v74
    %235 = vmatpush.msra.mxu0 %v70
    %236 = vmatpush.msra.mxu0 %v66
    %237 = vmatmul.f32.gmra.mxu0 %v56
    %v238 = vpop.f32.mrf.mxu0
    %v239 = vadd.f32 %v133, %v238
    %240 = vmatmul.f32.gmra.mxu0 %v57
    %v241 = vpop.f32.mrf.mxu0
    %v242 = vadd.f32 %v133, %v241
    %243 = vmatmul.f32.gmra.mxu0 %v58
    %v244 = vpop.f32.mrf.mxu0
    %v245 = vadd.f32 %v133, %v244
    %246 = vmatmul.f32.gmra.mxu0 %v59
    %v247 = vpop.f32.mrf.mxu0
    %v248 = vadd.f32 %v133, %v247
    %249 = vmatmul.f32.gmra.mxu0 %v60
    %v250 = vpop.f32.mrf.mxu0
    %v251 = vadd.f32 %v133, %v250
    %252 = vmatmul.f32.gmra.mxu0 %v61
    %v253 = vpop.f32.mrf.mxu0
    %v254 = vadd.f32 %v133, %v253
    %255 = vmatmul.f32.gmra.mxu0 %v62
    %v256 = vpop.f32.mrf.mxu0
    %v257 = vadd.f32 %v133, %v256
    %258 = vmatmul.f32.gmra.mxu0 %v63
    %v259 = vpop.f32.mrf.mxu0
    %v260 = vadd.f32 %v133, %v259
    %261 = vdwg.mxu0
    %262 = vmatpush.msra.mxu0 %v127
    %263 = vmatpush.msra.mxu0 %v123
    %264 = vmatpush.msra.mxu0 %v119
    %265 = vmatpush.msra.mxu0 %v115
    %266 = vmatpush.msra.mxu0 %v111
    %267 = vmatpush.msra.mxu0 %v107
    %268 = vmatpush.msra.mxu0 %v103
    %269 = vmatpush.msra.mxu0 %v99
    %270 = vmatpush.msra.mxu0 %v95
    %271 = vmatpush.msra.mxu0 %v91
    %272 = vmatpush.msra.mxu0 %v87
    %273 = vmatpush.msra.mxu0 %v83
    %274 = vmatpush.msra.mxu0 %v79
    %275 = vmatpush.msra.mxu0 %v75
    %276 = vmatpush.msra.mxu0 %v71
    %277 = vmatpush.msra.mxu0 %v67
    %278 = vmatmul.f32.gmra.mxu0 %v56
    %v279 = vpop.f32.mrf.mxu0
    %v280 = vadd.f32 %v134, %v279
    %281 = vmatmul.f32.gmra.mxu0 %v57
    %v282 = vpop.f32.mrf.mxu0
    %v283 = vadd.f32 %v134, %v282
    %284 = vmatmul.f32.gmra.mxu0 %v58
    %v285 = vpop.f32.mrf.mxu0
    %v286 = vadd.f32 %v134, %v285
    %287 = vmatmul.f32.gmra.mxu0 %v59
    %v288 = vpop.f32.mrf.mxu0
    %v289 = vadd.f32 %v134, %v288
    %290 = vmatmul.f32.gmra.mxu0 %v60
    %v291 = vpop.f32.mrf.mxu0
    %v292 = vadd.f32 %v134, %v291
    %293 = vmatmul.f32.gmra.mxu0 %v61
    %v294 = vpop.f32.mrf.mxu0
    %v295 = vadd.f32 %v134, %v294
    %296 = vmatmul.f32.gmra.mxu0 %v62
    %v297 = vpop.f32.mrf.mxu0
    %v298 = vadd.f32 %v134, %v297
    %299 = vmatmul.f32.gmra.mxu0 %v63
    %v300 = vpop.f32.mrf.mxu0
    %v301 = vadd.f32 %v134, %v300
    %302 = vdwg.mxu0
    %303 = vst [vmem:[#allocation2] sm:$0xff] %v157
    %304 = vst [vmem:[#allocation2 + $0x8] sm:$0xff] %v198
    %305 = vst [vmem:[#allocation2 + $0x10] sm:$0xff] %v239
    %306 = vst [vmem:[#allocation2 + $0x18] sm:$0xff] %v280
    %307 = vst [vmem:[#allocation2 + $0x20] sm:$0xff] %v160
    %308 = vst [vmem:[#allocation2 + $0x28] sm:$0xff] %v201
    %309 = vst [vmem:[#allocation2 + $0x30] sm:$0xff] %v242
    %310 = vst [vmem:[#allocation2 + $0x38] sm:$0xff] %v283
    %311 = vst [vmem:[#allocation2 + $0x40] sm:$0xff] %v163
    %312 = vst [vmem:[#allocation2 + $0x48] sm:$0xff] %v204
    %313 = vst [vmem:[#allocation2 + $0x50] sm:$0xff] %v245
    %314 = vst [vmem:[#allocation2 + $0x58] sm:$0xff] %v286
    %315 = vst [vmem:[#allocation2 + $0x60] sm:$0xff] %v166
    %316 = vst [vmem:[#allocation2 + $0x68] sm:$0xff] %v207
    %317 = vst [vmem:[#allocation2 + $0x70] sm:$0xff] %v248
    %318 = vst [vmem:[#allocation2 + $0x78] sm:$0xff] %v289
    %319 = vst [vmem:[#allocation2 + $0x80] sm:$0xff] %v169
    %320 = vst [vmem:[#allocation2 + $0x88] sm:$0xff] %v210
    %321 = vst [vmem:[#allocation2 + $0x90] sm:$0xff] %v251
    %322 = vst [vmem:[#allocation2 + $0x98] sm:$0xff] %v292
    %323 = vst [vmem:[#allocation2 + $0xa0] sm:$0xff] %v172
    %324 = vst [vmem:[#allocation2 + $0xa8] sm:$0xff] %v213
    %325 = vst [vmem:[#allocation2 + $0xb0] sm:$0xff] %v254
    %326 = vst [vmem:[#allocation2 + $0xb8] sm:$0xff] %v295
    %327 = vst [vmem:[#allocation2 + $0xc0] sm:$0xff] %v175
    %328 = vst [vmem:[#allocation2 + $0xc8] sm:$0xff] %v216
    %329 = vst [vmem:[#allocation2 + $0xd0] sm:$0xff] %v257
    %330 = vst [vmem:[#allocation2 + $0xd8] sm:$0xff] %v298
    %331 = vst [vmem:[#allocation2 + $0xe0] sm:$0xff] %v178
    %332 = vst [vmem:[#allocation2 + $0xe8] sm:$0xff] %v219
    %333 = vst [vmem:[#allocation2 + $0xf0] sm:$0xff] %v260
    %334 = vst [vmem:[#allocation2 + $0xf8] sm:$0xff] %v301
    %s335 = smul.u32 8, 16
    %s336 = smul.u32 %s335, 4
    %s337 = sshll.u32 %s336, 4
    %338 = dma.done [#allocation5], %s337
    %v339 = vld [vmem:[#allocation3] sm:$0xff]
    %v340 = vld [vmem:[#allocation3 + $0x8] sm:$0xff]
    %v341 = vld [vmem:[#allocation3 + $0x10] sm:$0xff]
    %v342 = vld [vmem:[#allocation3 + $0x18] sm:$0xff]
    %v343 = vld [vmem:[#allocation3 + $0x20] sm:$0xff]
    %v344 = vld [vmem:[#allocation3 + $0x28] sm:$0xff]
    %v345 = vld [vmem:[#allocation3 + $0x30] sm:$0xff]
    %v346 = vld [vmem:[#allocation3 + $0x38] sm:$0xff]
    %v347 = vld [vmem:[#allocation3 + $0x40] sm:$0xff]
    %v348 = vld [vmem:[#allocation3 + $0x48] sm:$0xff]
    %v349 = vld [vmem:[#allocation3 + $0x50] sm:$0xff]
    %v350 = vld [vmem:[#allocation3 + $0x58] sm:$0xff]
    %v351 = vld [vmem:[#allocation3 + $0x60] sm:$0xff]
    %v352 = vld [vmem:[#allocation3 + $0x68] sm:$0xff]
    %v353 = vld [vmem:[#allocation3 + $0x70] sm:$0xff]
    %v354 = vld [vmem:[#allocation3 + $0x78] sm:$0xff]
    %v355 = vld [vmem:[#allocation3 + $0x80] sm:$0xff]
    %v356 = vld [vmem:[#allocation3 + $0x88] sm:$0xff]
    %v357 = vld [vmem:[#allocation3 + $0x90] sm:$0xff]
    %v358 = vld [vmem:[#allocation3 + $0x98] sm:$0xff]
    %v359 = vld [vmem:[#allocation3 + $0xa0] sm:$0xff]
    %v360 = vld [vmem:[#allocation3 + $0xa8] sm:$0xff]
    %v361 = vld [vmem:[#allocation3 + $0xb0] sm:$0xff]
    %v362 = vld [vmem:[#allocation3 + $0xb8] sm:$0xff]
    %v363 = vld [vmem:[#allocation3 + $0xc0] sm:$0xff]
    %v364 = vld [vmem:[#allocation3 + $0xc8] sm:$0xff]
    %v365 = vld [vmem:[#allocation3 + $0xd0] sm:$0xff]
    %v366 = vld [vmem:[#allocation3 + $0xd8] sm:$0xff]
    %v367 = vld [vmem:[#allocation3 + $0xe0] sm:$0xff]
    %v368 = vld [vmem:[#allocation3 + $0xe8] sm:$0xff]
    %v369 = vld [vmem:[#allocation3 + $0xf0] sm:$0xff]
    %v370 = vld [vmem:[#allocation3 + $0xf8] sm:$0xff]
    %v371 = vld [vmem:[#allocation3 + $0x100] sm:$0xff]
    %v372 = vld [vmem:[#allocation3 + $0x108] sm:$0xff]
    %v373 = vld [vmem:[#allocation3 + $0x110] sm:$0xff]
    %v374 = vld [vmem:[#allocation3 + $0x118] sm:$0xff]
    %v375 = vld [vmem:[#allocation3 + $0x120] sm:$0xff]
    %v376 = vld [vmem:[#allocation3 + $0x128] sm:$0xff]
    %v377 = vld [vmem:[#allocation3 + $0x130] sm:$0xff]
    %v378 = vld [vmem:[#allocation3 + $0x138] sm:$0xff]
    %v379 = vld [vmem:[#allocation3 + $0x140] sm:$0xff]
    %v380 = vld [vmem:[#allocation3 + $0x148] sm:$0xff]
    %v381 = vld [vmem:[#allocation3 + $0x150] sm:$0xff]
    %v382 = vld [vmem:[#allocation3 + $0x158] sm:$0xff]
    %v383 = vld [vmem:[#allocation3 + $0x160] sm:$0xff]
    %v384 = vld [vmem:[#allocation3 + $0x168] sm:$0xff]
    %v385 = vld [vmem:[#allocation3 + $0x170] sm:$0xff]
    %v386 = vld [vmem:[#allocation3 + $0x178] sm:$0xff]
    %v387 = vld [vmem:[#allocation3 + $0x180] sm:$0xff]
    %v388 = vld [vmem:[#allocation3 + $0x188] sm:$0xff]
    %v389 = vld [vmem:[#allocation3 + $0x190] sm:$0xff]
    %v390 = vld [vmem:[#allocation3 + $0x198] sm:$0xff]
    %v391 = vld [vmem:[#allocation3 + $0x1a0] sm:$0xff]
    %v392 = vld [vmem:[#allocation3 + $0x1a8] sm:$0xff]
    %v393 = vld [vmem:[#allocation3 + $0x1b0] sm:$0xff]
    %v394 = vld [vmem:[#allocation3 + $0x1b8] sm:$0xff]
    %v395 = vld [vmem:[#allocation3 + $0x1c0] sm:$0xff]
    %v396 = vld [vmem:[#allocation3 + $0x1c8] sm:$0xff]
    %v397 = vld [vmem:[#allocation3 + $0x1d0] sm:$0xff]
    %v398 = vld [vmem:[#allocation3 + $0x1d8] sm:$0xff]
    %v399 = vld [vmem:[#allocation3 + $0x1e0] sm:$0xff]
    %v400 = vld [vmem:[#allocation3 + $0x1e8] sm:$0xff]
    %v401 = vld [vmem:[#allocation3 + $0x1f0] sm:$0xff]
    %v402 = vld [vmem:[#allocation3 + $0x1f8] sm:$0xff]
    %v403 = vld [vmem:[#allocation2] sm:$0xff]
    %v404 = vld [vmem:[#allocation2 + $0x8] sm:$0xff]
    %v405 = vld [vmem:[#allocation2 + $0x10] sm:$0xff]
    %v406 = vld [vmem:[#allocation2 + $0x18] sm:$0xff]
    %407 = vmatpush.msra.mxu0 %v399
    %408 = vmatpush.msra.mxu0 %v395
    %409 = vmatpush.msra.mxu0 %v391
    %410 = vmatpush.msra.mxu0 %v387
    %411 = vmatpush.msra.mxu0 %v383
    %412 = vmatpush.msra.mxu0 %v379
    %413 = vmatpush.msra.mxu0 %v375
    %414 = vmatpush.msra.mxu0 %v371
    %415 = vmatpush.msra.mxu0 %v367
    %416 = vmatpush.msra.mxu0 %v363
    %417 = vmatpush.msra.mxu0 %v359
    %418 = vmatpush.msra.mxu0 %v355
    %419 = vmatpush.msra.mxu0 %v351
    %420 = vmatpush.msra.mxu0 %v347
    %421 = vmatpush.msra.mxu0 %v343
    %422 = vmatpush.msra.mxu0 %v339
    %423 = vmatmul.f32.gmra.mxu0 0.0
    %v424 = vpop.f32.mrf.mxu0
    %v425 = vadd.f32 0.0, %v424
    %426 = vdwg.mxu0
    %427 = vmatpush.msra.mxu0 %v400
    %428 = vmatpush.msra.mxu0 %v396
    %429 = vmatpush.msra.mxu0 %v392
    %430 = vmatpush.msra.mxu0 %v388
    %431 = vmatpush.msra.mxu0 %v384
    %432 = vmatpush.msra.mxu0 %v380
    %433 = vmatpush.msra.mxu0 %v376
    %434 = vmatpush.msra.mxu0 %v372
    %435 = vmatpush.msra.mxu0 %v368
    %436 = vmatpush.msra.mxu0 %v364
    %437 = vmatpush.msra.mxu0 %v360
    %438 = vmatpush.msra.mxu0 %v356
    %439 = vmatpush.msra.mxu0 %v352
    %440 = vmatpush.msra.mxu0 %v348
    %441 = vmatpush.msra.mxu0 %v344
    %442 = vmatpush.msra.mxu0 %v340
    %443 = vmatmul.f32.gmra.mxu0 0.0
    %v444 = vpop.f32.mrf.mxu0
    %v445 = vadd.f32 0.0, %v444
    %446 = vdwg.mxu0
    %447 = vmatpush.msra.mxu0 %v401
    %448 = vmatpush.msra.mxu0 %v397
    %449 = vmatpush.msra.mxu0 %v393
    %450 = vmatpush.msra.mxu0 %v389
    %451 = vmatpush.msra.mxu0 %v385
    %452 = vmatpush.msra.mxu0 %v381
    %453 = vmatpush.msra.mxu0 %v377
    %454 = vmatpush.msra.mxu0 %v373
    %455 = vmatpush.msra.mxu0 %v369
    %456 = vmatpush.msra.mxu0 %v365
    %457 = vmatpush.msra.mxu0 %v361
    %458 = vmatpush.msra.mxu0 %v357
    %459 = vmatpush.msra.mxu0 %v353
    %460 = vmatpush.msra.mxu0 %v349
    %461 = vmatpush.msra.mxu0 %v345
    %462 = vmatpush.msra.mxu0 %v341
    %463 = vmatmul.f32.gmra.mxu0 0.0
    %v464 = vpop.f32.mrf.mxu0
    %v465 = vadd.f32 0.0, %v464
    %466 = vdwg.mxu0
    %467 = vmatpush.msra.mxu0 %v402
    %468 = vmatpush.msra.mxu0 %v398
    %469 = vmatpush.msra.mxu0 %v394
    %470 = vmatpush.msra.mxu0 %v390
    %471 = vmatpush.msra.mxu0 %v386
    %472 = vmatpush.msra.mxu0 %v382
    %473 = vmatpush.msra.mxu0 %v378
    %474 = vmatpush.msra.mxu0 %v374
    %475 = vmatpush.msra.mxu0 %v370
    %476 = vmatpush.msra.mxu0 %v366
    %477 = vmatpush.msra.mxu0 %v362
    %478 = vmatpush.msra.mxu0 %v358
    %479 = vmatpush.msra.mxu0 %v354
    %480 = vmatpush.msra.mxu0 %v350
    %481 = vmatpush.msra.mxu0 %v346
    %482 = vmatpush.msra.mxu0 %v342
    %483 = vmatmul.f32.gmra.mxu0 0.0
    %v484 = vpop.f32.mrf.mxu0
    %v485 = vadd.f32 0.0, %v484
    %486 = vdwg.mxu0
    %v487 = vadd.f32 %v403, %v425
    %v488 = vadd.f32 %v404, %v445
    %v489 = vadd.f32 %v405, %v465
    %v490 = vadd.f32 %v406, %v485
    %v491 = vxor.u32 %v487, 2147483648
    %v492 = vmul.f32 %v491, 1.442695
    %v493 = vpow.pop %v492
    %v494 = vadd.f32 %v493, 1.0
    %v495 = vrcp.pop %v494
    %v496 = vmul.f32 %v494, %v495
    %v497 = vsub.f32 1.0, %v496
    %v498 = vmul.f32 %v495, %v497
    %v499 = vadd.f32 %v495, %v498
    %vm500 = vweird.f32 %v494
    %vm501 = vweird.f32 %v495
    %vm502 = vmor %vm500, %vm501
    %v503 = vsel %vm502, %v495, %v499
    %v504 = vand.u32 2147483647, %v494
    %vm505 = vcmp.eq.f32.partialorder %v504, 8.507059e+37
    %v506 = vand.u32 %v494, 2147483648
    %v507 = vor.u32 1.1754944e-38, %v506
    %v508 = vsel %vm505, %v507, %v503
    %v509 = vmul.f32 1.0, %v508
    %v510 = vxor.u32 %v488, 2147483648
    %v511 = vmul.f32 %v510, 1.442695
    %v512 = vpow.pop %v511
    %v513 = vadd.f32 %v512, 1.0
    %v514 = vrcp.pop %v513
    %v515 = vmul.f32 %v513, %v514
    %v516 = vsub.f32 1.0, %v515
    %v517 = vmul.f32 %v514, %v516
    %v518 = vadd.f32 %v514, %v517
    %vm519 = vweird.f32 %v513
    %vm520 = vweird.f32 %v514
    %vm521 = vmor %vm519, %vm520
    %v522 = vsel %vm521, %v514, %v518
    %v523 = vand.u32 2147483647, %v513
    %vm524 = vcmp.eq.f32.partialorder %v523, 8.507059e+37
    %v525 = vand.u32 %v513, 2147483648
    %v526 = vor.u32 1.1754944e-38, %v525
    %v527 = vsel %vm524, %v526, %v522
    %v528 = vmul.f32 1.0, %v527
    %v529 = vtanh.pop %v489
    %v530 = vxor.u32 %v490, 2147483648
    %v531 = vmul.f32 %v530, 1.442695
    %v532 = vpow.pop %v531
    %v533 = vadd.f32 %v532, 1.0
    %v534 = vrcp.pop %v533
    %v535 = vmul.f32 %v533, %v534
    %v536 = vsub.f32 1.0, %v535
    %v537 = vmul.f32 %v534, %v536
    %v538 = vadd.f32 %v534, %v537
    %vm539 = vweird.f32 %v533
    %vm540 = vweird.f32 %v534
    %vm541 = vmor %vm539, %vm540
    %v542 = vsel %vm541, %v534, %v538
    %v543 = vand.u32 2147483647, %v533
    %vm544 = vcmp.eq.f32.partialorder %v543, 8.507059e+37
    %v545 = vand.u32 %v533, 2147483648
    %v546 = vor.u32 1.1754944e-38, %v545
    %v547 = vsel %vm544, %v546, %v542
    %v548 = vmul.f32 1.0, %v547
    %v549 = vmul.f32 %v528, 0.0
    %v550 = vmul.f32 %v509, %v529
    %v551 = vadd.f32 %v549, %v550
    %v552 = vtanh.pop %v551
    %v553 = vmul.f32 %v548, %v552
    %v554 = vld [vmem:[#allocation2 + $0x20] sm:$0xff]
    %v555 = vld [vmem:[#allocation2 + $0x28] sm:$0xff]
    %v556 = vld [vmem:[#allocation2 + $0x30] sm:$0xff]
    %v557 = vld [vmem:[#allocation2 + $0x38] sm:$0xff]
    %558 = vmatpush.msra.mxu0 %v399
    %559 = vmatpush.msra.mxu0 %v395
    %560 = vmatpush.msra.mxu0 %v391
    %561 = vmatpush.msra.mxu0 %v387
    %562 = vmatpush.msra.mxu0 %v383
    %563 = vmatpush.msra.mxu0 %v379
    %564 = vmatpush.msra.mxu0 %v375
    %565 = vmatpush.msra.mxu0 %v371
    %566 = vmatpush.msra.mxu0 %v367
    %567 = vmatpush.msra.mxu0 %v363
    %568 = vmatpush.msra.mxu0 %v359
    %569 = vmatpush.msra.mxu0 %v355
    %570 = vmatpush.msra.mxu0 %v351
    %571 = vmatpush.msra.mxu0 %v347
    %572 = vmatpush.msra.mxu0 %v343
    %573 = vmatpush.msra.mxu0 %v339
    %574 = vmatmul.f32.gmra.mxu0 %v553
    %v575 = vpop.f32.mrf.mxu0
    %v576 = vadd.f32 0.0, %v575
    %577 = vdwg.mxu0
    %578 = vmatpush.msra.mxu0 %v400
    %579 = vmatpush.msra.mxu0 %v396
    %580 = vmatpush.msra.mxu0 %v392
    %581 = vmatpush.msra.mxu0 %v388
    %582 = vmatpush.msra.mxu0 %v384
    %583 = vmatpush.msra.mxu0 %v380
    %584 = vmatpush.msra.mxu0 %v376
    %585 = vmatpush.msra.mxu0 %v372
    %586 = vmatpush.msra.mxu0 %v368
    %587 = vmatpush.msra.mxu0 %v364
    %588 = vmatpush.msra.mxu0 %v360
    %589 = vmatpush.msra.mxu0 %v356
    %590 = vmatpush.msra.mxu0 %v352
    %591 = vmatpush.msra.mxu0 %v348
    %592 = vmatpush.msra.mxu0 %v344
    %593 = vmatpush.msra.mxu0 %v340
    %594 = vmatmul.f32.gmra.mxu0 %v553
    %v595 = vpop.f32.mrf.mxu0
    %v596 = vadd.f32 0.0, %v595
    %597 = vdwg.mxu0
    %598 = vmatpush.msra.mxu0 %v401
    %599 = vmatpush.msra.mxu0 %v397
    %600 = vmatpush.msra.mxu0 %v393
    %601 = vmatpush.msra.mxu0 %v389
    %602 = vmatpush.msra.mxu0 %v385
    %603 = vmatpush.msra.mxu0 %v381
    %604 = vmatpush.msra.mxu0 %v377
    %605 = vmatpush.msra.mxu0 %v373
    %606 = vmatpush.msra.mxu0 %v369
    %607 = vmatpush.msra.mxu0 %v365
    %608 = vmatpush.msra.mxu0 %v361
    %609 = vmatpush.msra.mxu0 %v357
    %610 = vmatpush.msra.mxu0 %v353
    %611 = vmatpush.msra.mxu0 %v349
    %612 = vmatpush.msra.mxu0 %v345
    %613 = vmatpush.msra.mxu0 %v341
    %614 = vmatmul.f32.gmra.mxu0 %v553
    %v615 = vpop.f32.mrf.mxu0
    %v616 = vadd.f32 0.0, %v615
    %617 = vdwg.mxu0
    %618 = vmatpush.msra.mxu0 %v402
    %619 = vmatpush.msra.mxu0 %v398
    %620 = vmatpush.msra.mxu0 %v394
    %621 = vmatpush.msra.mxu0 %v390
    %622 = vmatpush.msra.mxu0 %v386
    %623 = vmatpush.msra.mxu0 %v382
    %624 = vmatpush.msra.mxu0 %v378
    %625 = vmatpush.msra.mxu0 %v374
    %626 = vmatpush.msra.mxu0 %v370
    %627 = vmatpush.msra.mxu0 %v366
    %628 = vmatpush.msra.mxu0 %v362
    %629 = vmatpush.msra.mxu0 %v358
    %630 = vmatpush.msra.mxu0 %v354
    %631 = vmatpush.msra.mxu0 %v350
    %632 = vmatpush.msra.mxu0 %v346
    %633 = vmatpush.msra.mxu0 %v342
    %634 = vmatmul.f32.gmra.mxu0 %v553
    %v635 = vpop.f32.mrf.mxu0
    %v636 = vadd.f32 0.0, %v635
    %637 = vdwg.mxu0
    %v638 = vadd.f32 %v554, %v576
    %v639 = vadd.f32 %v555, %v596
    %v640 = vadd.f32 %v556, %v616
    %v641 = vadd.f32 %v557, %v636
    %v642 = vxor.u32 %v638, 2147483648
    %v643 = vmul.f32 %v642, 1.442695
    %v644 = vpow.pop %v643
    %v645 = vadd.f32 %v644, 1.0
    %v646 = vrcp.pop %v645
    %v647 = vmul.f32 %v645, %v646
    %v648 = vsub.f32 1.0, %v647
    %v649 = vmul.f32 %v646, %v648
    %v650 = vadd.f32 %v646, %v649
    %vm651 = vweird.f32 %v645
    %vm652 = vweird.f32 %v646
    %vm653 = vmor %vm651, %vm652
    %v654 = vsel %vm653, %v646, %v650
    %v655 = vand.u32 2147483647, %v645
    %vm656 = vcmp.eq.f32.partialorder %v655, 8.507059e+37
    %v657 = vand.u32 %v645, 2147483648
    %v658 = vor.u32 1.1754944e-38, %v657
    %v659 = vsel %vm656, %v658, %v654
    %v660 = vmul.f32 1.0, %v659
    %v661 = vxor.u32 %v639, 2147483648
    %v662 = vmul.f32 %v661, 1.442695
    %v663 = vpow.pop %v662
    %v664 = vadd.f32 %v663, 1.0
    %v665 = vrcp.pop %v664
    %v666 = vmul.f32 %v664, %v665
    %v667 = vsub.f32 1.0, %v666
    %v668 = vmul.f32 %v665, %v667
    %v669 = vadd.f32 %v665, %v668
    %vm670 = vweird.f32 %v664
    %vm671 = vweird.f32 %v665
    %vm672 = vmor %vm670, %vm671
    %v673 = vsel %vm672, %v665, %v669
    %v674 = vand.u32 2147483647, %v664
    %vm675 = vcmp.eq.f32.partialorder %v674, 8.507059e+37
    %v676 = vand.u32 %v664, 2147483648
    %v677 = vor.u32 1.1754944e-38, %v676
    %v678 = vsel %vm675, %v677, %v673
    %v679 = vmul.f32 1.0, %v678
    %v680 = vtanh.pop %v640
    %v681 = vxor.u32 %v641, 2147483648
    %v682 = vmul.f32 %v681, 1.442695
    %v683 = vpow.pop %v682
    %v684 = vadd.f32 %v683, 1.0
    %v685 = vrcp.pop %v684
    %v686 = vmul.f32 %v684, %v685
    %v687 = vsub.f32 1.0, %v686
    %v688 = vmul.f32 %v685, %v687
    %v689 = vadd.f32 %v685, %v688
    %vm690 = vweird.f32 %v684
    %vm691 = vweird.f32 %v685
    %vm692 = vmor %vm690, %vm691
    %v693 = vsel %vm692, %v685, %v689
    %v694 = vand.u32 2147483647, %v684
    %vm695 = vcmp.eq.f32.partialorder %v694, 8.507059e+37
    %v696 = vand.u32 %v684, 2147483648
    %v697 = vor.u32 1.1754944e-38, %v696
    %v698 = vsel %vm695, %v697, %v693
    %v699 = vmul.f32 1.0, %v698
    %v700 = vmul.f32 %v679, %v551
    %v701 = vmul.f32 %v660, %v680
    %v702 = vadd.f32 %v700, %v701
    %v703 = vtanh.pop %v702
    %v704 = vmul.f32 %v699, %v703
    %v705 = vld [vmem:[#allocation2 + $0x40] sm:$0xff]
    %v706 = vld [vmem:[#allocation2 + $0x48] sm:$0xff]
    %v707 = vld [vmem:[#allocation2 + $0x50] sm:$0xff]
    %v708 = vld [vmem:[#allocation2 + $0x58] sm:$0xff]
    %709 = vmatpush.msra.mxu0 %v399
    %710 = vmatpush.msra.mxu0 %v395
    %711 = vmatpush.msra.mxu0 %v391
    %712 = vmatpush.msra.mxu0 %v387
    %713 = vmatpush.msra.mxu0 %v383
    %714 = vmatpush.msra.mxu0 %v379
    %715 = vmatpush.msra.mxu0 %v375
    %716 = vmatpush.msra.mxu0 %v371
    %717 = vmatpush.msra.mxu0 %v367
    %718 = vmatpush.msra.mxu0 %v363
    %719 = vmatpush.msra.mxu0 %v359
    %720 = vmatpush.msra.mxu0 %v355
    %721 = vmatpush.msra.mxu0 %v351
    %722 = vmatpush.msra.mxu0 %v347
    %723 = vmatpush.msra.mxu0 %v343
    %724 = vmatpush.msra.mxu0 %v339
    %725 = vmatmul.f32.gmra.mxu0 %v704
    %v726 = vpop.f32.mrf.mxu0
    %v727 = vadd.f32 0.0, %v726
    %728 = vdwg.mxu0
    %729 = vmatpush.msra.mxu0 %v400
    %730 = vmatpush.msra.mxu0 %v396
    %731 = vmatpush.msra.mxu0 %v392
    %732 = vmatpush.msra.mxu0 %v388
    %733 = vmatpush.msra.mxu0 %v384
    %734 = vmatpush.msra.mxu0 %v380
    %735 = vmatpush.msra.mxu0 %v376
    %736 = vmatpush.msra.mxu0 %v372
    %737 = vmatpush.msra.mxu0 %v368
    %738 = vmatpush.msra.mxu0 %v364
    %739 = vmatpush.msra.mxu0 %v360
    %740 = vmatpush.msra.mxu0 %v356
    %741 = vmatpush.msra.mxu0 %v352
    %742 = vmatpush.msra.mxu0 %v348
    %743 = vmatpush.msra.mxu0 %v344
    %744 = vmatpush.msra.mxu0 %v340
    %745 = vmatmul.f32.gmra.mxu0 %v704
    %v746 = vpop.f32.mrf.mxu0
    %v747 = vadd.f32 0.0, %v746
    %748 = vdwg.mxu0
    %749 = vmatpush.msra.mxu0 %v401
    %750 = vmatpush.msra.mxu0 %v397
    %751 = vmatpush.msra.mxu0 %v393
    %752 = vmatpush.msra.mxu0 %v389
    %753 = vmatpush.msra.mxu0 %v385
    %754 = vmatpush.msra.mxu0 %v381
    %755 = vmatpush.msra.mxu0 %v377
    %756 = vmatpush.msra.mxu0 %v373
    %757 = vmatpush.msra.mxu0 %v369
    %758 = vmatpush.msra.mxu0 %v365
    %759 = vmatpush.msra.mxu0 %v361
    %760 = vmatpush.msra.mxu0 %v357
    %761 = vmatpush.msra.mxu0 %v353
    %762 = vmatpush.msra.mxu0 %v349
    %763 = vmatpush.msra.mxu0 %v345
    %764 = vmatpush.msra.mxu0 %v341
    %765 = vmatmul.f32.gmra.mxu0 %v704
    %v766 = vpop.f32.mrf.mxu0
    %v767 = vadd.f32 0.0, %v766
    %768 = vdwg.mxu0
    %769 = vmatpush.msra.mxu0 %v402
    %770 = vmatpush.msra.mxu0 %v398
    %771 = vmatpush.msra.mxu0 %v394
    %772 = vmatpush.msra.mxu0 %v390
    %773 = vmatpush.msra.mxu0 %v386
    %774 = vmatpush.msra.mxu0 %v382
    %775 = vmatpush.msra.mxu0 %v378
    %776 = vmatpush.msra.mxu0 %v374
    %777 = vmatpush.msra.mxu0 %v370
    %778 = vmatpush.msra.mxu0 %v366
    %779 = vmatpush.msra.mxu0 %v362
    %780 = vmatpush.msra.mxu0 %v358
    %781 = vmatpush.msra.mxu0 %v354
    %782 = vmatpush.msra.mxu0 %v350
    %783 = vmatpush.msra.mxu0 %v346
    %784 = vmatpush.msra.mxu0 %v342
    %785 = vmatmul.f32.gmra.mxu0 %v704
    %v786 = vpop.f32.mrf.mxu0
    %v787 = vadd.f32 0.0, %v786
    %788 = vdwg.mxu0
    %v789 = vadd.f32 %v705, %v727
    %v790 = vadd.f32 %v706, %v747
    %v791 = vadd.f32 %v707, %v767
    %v792 = vadd.f32 %v708, %v787
    %v793 = vxor.u32 %v789, 2147483648
    %v794 = vmul.f32 %v793, 1.442695
    %v795 = vpow.pop %v794
    %v796 = vadd.f32 %v795, 1.0
    %v797 = vrcp.pop %v796
    %v798 = vmul.f32 %v796, %v797
    %v799 = vsub.f32 1.0, %v798
    %v800 = vmul.f32 %v797, %v799
    %v801 = vadd.f32 %v797, %v800
    %vm802 = vweird.f32 %v796
    %vm803 = vweird.f32 %v797
    %vm804 = vmor %vm802, %vm803
    %v805 = vsel %vm804, %v797, %v801
    %v806 = vand.u32 2147483647, %v796
    %vm807 = vcmp.eq.f32.partialorder %v806, 8.507059e+37
    %v808 = vand.u32 %v796, 2147483648
    %v809 = vor.u32 1.1754944e-38, %v808
    %v810 = vsel %vm807, %v809, %v805
    %v811 = vmul.f32 1.0, %v810
    %v812 = vxor.u32 %v790, 2147483648
    %v813 = vmul.f32 %v812, 1.442695
    %v814 = vpow.pop %v813
    %v815 = vadd.f32 %v814, 1.0
    %v816 = vrcp.pop %v815
    %v817 = vmul.f32 %v815, %v816
    %v818 = vsub.f32 1.0, %v817
    %v819 = vmul.f32 %v816, %v818
    %v820 = vadd.f32 %v816, %v819
    %vm821 = vweird.f32 %v815
    %vm822 = vweird.f32 %v816
    %vm823 = vmor %vm821, %vm822
    %v824 = vsel %vm823, %v816, %v820
    %v825 = vand.u32 2147483647, %v815
    %vm826 = vcmp.eq.f32.partialorder %v825, 8.507059e+37
    %v827 = vand.u32 %v815, 2147483648
    %v828 = vor.u32 1.1754944e-38, %v827
    %v829 = vsel %vm826, %v828, %v824
    %v830 = vmul.f32 1.0, %v829
    %v831 = vtanh.pop %v791
    %v832 = vxor.u32 %v792, 2147483648
    %v833 = vmul.f32 %v832, 1.442695
    %v834 = vpow.pop %v833
    %v835 = vadd.f32 %v834, 1.0
    %v836 = vrcp.pop %v835
    %v837 = vmul.f32 %v835, %v836
    %v838 = vsub.f32 1.0, %v837
    %v839 = vmul.f32 %v836, %v838
    %v840 = vadd.f32 %v836, %v839
    %vm841 = vweird.f32 %v835
    %vm842 = vweird.f32 %v836
    %vm843 = vmor %vm841, %vm842
    %v844 = vsel %vm843, %v836, %v840
    %v845 = vand.u32 2147483647, %v835
    %vm846 = vcmp.eq.f32.partialorder %v845, 8.507059e+37
    %v847 = vand.u32 %v835, 2147483648
    %v848 = vor.u32 1.1754944e-38, %v847
    %v849 = vsel %vm846, %v848, %v844
    %v850 = vmul.f32 1.0, %v849
    %v851 = vmul.f32 %v830, %v702
    %v852 = vmul.f32 %v811, %v831
    %v853 = vadd.f32 %v851, %v852
    %v854 = vtanh.pop %v853
    %v855 = vmul.f32 %v850, %v854
    %v856 = vld [vmem:[#allocation2 + $0x60] sm:$0xff]
    %v857 = vld [vmem:[#allocation2 + $0x68] sm:$0xff]
    %v858 = vld [vmem:[#allocation2 + $0x70] sm:$0xff]
    %v859 = vld [vmem:[#allocation2 + $0x78] sm:$0xff]
    %860 = vmatpush.msra.mxu0 %v399
    %861 = vmatpush.msra.mxu0 %v395
    %862 = vmatpush.msra.mxu0 %v391
    %863 = vmatpush.msra.mxu0 %v387
    %864 = vmatpush.msra.mxu0 %v383
    %865 = vmatpush.msra.mxu0 %v379
    %866 = vmatpush.msra.mxu0 %v375
    %867 = vmatpush.msra.mxu0 %v371
    %868 = vmatpush.msra.mxu0 %v367
    %869 = vmatpush.msra.mxu0 %v363
    %870 = vmatpush.msra.mxu0 %v359
    %871 = vmatpush.msra.mxu0 %v355
    %872 = vmatpush.msra.mxu0 %v351
    %873 = vmatpush.msra.mxu0 %v347
    %874 = vmatpush.msra.mxu0 %v343
    %875 = vmatpush.msra.mxu0 %v339
    %876 = vmatmul.f32.gmra.mxu0 %v855
    %v877 = vpop.f32.mrf.mxu0
    %v878 = vadd.f32 0.0, %v877
    %879 = vdwg.mxu0
    %880 = vmatpush.msra.mxu0 %v400
    %881 = vmatpush.msra.mxu0 %v396
    %882 = vmatpush.msra.mxu0 %v392
    %883 = vmatpush.msra.mxu0 %v388
    %884 = vmatpush.msra.mxu0 %v384
    %885 = vmatpush.msra.mxu0 %v380
    %886 = vmatpush.msra.mxu0 %v376
    %887 = vmatpush.msra.mxu0 %v372
    %888 = vmatpush.msra.mxu0 %v368
    %889 = vmatpush.msra.mxu0 %v364
    %890 = vmatpush.msra.mxu0 %v360
    %891 = vmatpush.msra.mxu0 %v356
    %892 = vmatpush.msra.mxu0 %v352
    %893 = vmatpush.msra.mxu0 %v348
    %894 = vmatpush.msra.mxu0 %v344
    %895 = vmatpush.msra.mxu0 %v340
    %896 = vmatmul.f32.gmra.mxu0 %v855
    %v897 = vpop.f32.mrf.mxu0
    %v898 = vadd.f32 0.0, %v897
    %899 = vdwg.mxu0
    %900 = vmatpush.msra.mxu0 %v401
    %901 = vmatpush.msra.mxu0 %v397
    %902 = vmatpush.msra.mxu0 %v393
    %903 = vmatpush.msra.mxu0 %v389
    %904 = vmatpush.msra.mxu0 %v385
    %905 = vmatpush.msra.mxu0 %v381
    %906 = vmatpush.msra.mxu0 %v377
    %907 = vmatpush.msra.mxu0 %v373
    %908 = vmatpush.msra.mxu0 %v369
    %909 = vmatpush.msra.mxu0 %v365
    %910 = vmatpush.msra.mxu0 %v361
    %911 = vmatpush.msra.mxu0 %v357
    %912 = vmatpush.msra.mxu0 %v353
    %913 = vmatpush.msra.mxu0 %v349
    %914 = vmatpush.msra.mxu0 %v345
    %915 = vmatpush.msra.mxu0 %v341
    %916 = vmatmul.f32.gmra.mxu0 %v855
    %v917 = vpop.f32.mrf.mxu0
    %v918 = vadd.f32 0.0, %v917
    %919 = vdwg.mxu0
    %920 = vmatpush.msra.mxu0 %v402
    %921 = vmatpush.msra.mxu0 %v398
    %922 = vmatpush.msra.mxu0 %v394
    %923 = vmatpush.msra.mxu0 %v390
    %924 = vmatpush.msra.mxu0 %v386
    %925 = vmatpush.msra.mxu0 %v382
    %926 = vmatpush.msra.mxu0 %v378
    %927 = vmatpush.msra.mxu0 %v374
    %928 = vmatpush.msra.mxu0 %v370
    %929 = vmatpush.msra.mxu0 %v366
    %930 = vmatpush.msra.mxu0 %v362
    %931 = vmatpush.msra.mxu0 %v358
    %932 = vmatpush.msra.mxu0 %v354
    %933 = vmatpush.msra.mxu0 %v350
    %934 = vmatpush.msra.mxu0 %v346
    %935 = vmatpush.msra.mxu0 %v342
    %936 = vmatmul.f32.gmra.mxu0 %v855
    %v937 = vpop.f32.mrf.mxu0
    %v938 = vadd.f32 0.0, %v937
    %939 = vdwg.mxu0
    %v940 = vadd.f32 %v856, %v878
    %v941 = vadd.f32 %v857, %v898
    %v942 = vadd.f32 %v858, %v918
    %v943 = vadd.f32 %v859, %v938
    %v944 = vxor.u32 %v940, 2147483648
    %v945 = vmul.f32 %v944, 1.442695
    %v946 = vpow.pop %v945
    %v947 = vadd.f32 %v946, 1.0
    %v948 = vrcp.pop %v947
    %v949 = vmul.f32 %v947, %v948
    %v950 = vsub.f32 1.0, %v949
    %v951 = vmul.f32 %v948, %v950
    %v952 = vadd.f32 %v948, %v951
    %vm953 = vweird.f32 %v947
    %vm954 = vweird.f32 %v948
    %vm955 = vmor %vm953, %vm954
    %v956 = vsel %vm955, %v948, %v952
    %v957 = vand.u32 2147483647, %v947
    %vm958 = vcmp.eq.f32.partialorder %v957, 8.507059e+37
    %v959 = vand.u32 %v947, 2147483648
    %v960 = vor.u32 1.1754944e-38, %v959
    %v961 = vsel %vm958, %v960, %v956
    %v962 = vmul.f32 1.0, %v961
    %v963 = vxor.u32 %v941, 2147483648
    %v964 = vmul.f32 %v963, 1.442695
    %v965 = vpow.pop %v964
    %v966 = vadd.f32 %v965, 1.0
    %v967 = vrcp.pop %v966
    %v968 = vmul.f32 %v966, %v967
    %v969 = vsub.f32 1.0, %v968
    %v970 = vmul.f32 %v967, %v969
    %v971 = vadd.f32 %v967, %v970
    %vm972 = vweird.f32 %v966
    %vm973 = vweird.f32 %v967
    %vm974 = vmor %vm972, %vm973
    %v975 = vsel %vm974, %v967, %v971
    %v976 = vand.u32 2147483647, %v966
    %vm977 = vcmp.eq.f32.partialorder %v976, 8.507059e+37
    %v978 = vand.u32 %v966, 2147483648
    %v979 = vor.u32 1.1754944e-38, %v978
    %v980 = vsel %vm977, %v979, %v975
    %v981 = vmul.f32 1.0, %v980
    %v982 = vtanh.pop %v942
    %v983 = vxor.u32 %v943, 2147483648
    %v984 = vmul.f32 %v983, 1.442695
    %v985 = vpow.pop %v984
    %v986 = vadd.f32 %v985, 1.0
    %v987 = vrcp.pop %v986
    %v988 = vmul.f32 %v986, %v987
    %v989 = vsub.f32 1.0, %v988
    %v990 = vmul.f32 %v987, %v989
    %v991 = vadd.f32 %v987, %v990
    %vm992 = vweird.f32 %v986
    %vm993 = vweird.f32 %v987
    %vm994 = vmor %vm992, %vm993
    %v995 = vsel %vm994, %v987, %v991
    %v996 = vand.u32 2147483647, %v986
    %vm997 = vcmp.eq.f32.partialorder %v996, 8.507059e+37
    %v998 = vand.u32 %v986, 2147483648
    %v999 = vor.u32 1.1754944e-38, %v998
    %v1000 = vsel %vm997, %v999, %v995
    %v1001 = vmul.f32 1.0, %v1000
    %v1002 = vmul.f32 %v981, %v853
    %v1003 = vmul.f32 %v962, %v982
    %v1004 = vadd.f32 %v1002, %v1003
    %v1005 = vtanh.pop %v1004
    %v1006 = vmul.f32 %v1001, %v1005
    %v1007 = vld [vmem:[#allocation2 + $0x80] sm:$0xff]
    %v1008 = vld [vmem:[#allocation2 + $0x88] sm:$0xff]
    %v1009 = vld [vmem:[#allocation2 + $0x90] sm:$0xff]
    %v1010 = vld [vmem:[#allocation2 + $0x98] sm:$0xff]
    %1011 = vmatpush.msra.mxu0 %v399
    %1012 = vmatpush.msra.mxu0 %v395
    %1013 = vmatpush.msra.mxu0 %v391
    %1014 = vmatpush.msra.mxu0 %v387
    %1015 = vmatpush.msra.mxu0 %v383
    %1016 = vmatpush.msra.mxu0 %v379
    %1017 = vmatpush.msra.mxu0 %v375
    %1018 = vmatpush.msra.mxu0 %v371
    %1019 = vmatpush.msra.mxu0 %v367
    %1020 = vmatpush.msra.mxu0 %v363
    %1021 = vmatpush.msra.mxu0 %v359
    %1022 = vmatpush.msra.mxu0 %v355
    %1023 = vmatpush.msra.mxu0 %v351
    %1024 = vmatpush.msra.mxu0 %v347
    %1025 = vmatpush.msra.mxu0 %v343
    %1026 = vmatpush.msra.mxu0 %v339
    %1027 = vmatmul.f32.gmra.mxu0 %v1006
    %v1028 = vpop.f32.mrf.mxu0
    %v1029 = vadd.f32 0.0, %v1028
    %1030 = vdwg.mxu0
    %1031 = vmatpush.msra.mxu0 %v400
    %1032 = vmatpush.msra.mxu0 %v396
    %1033 = vmatpush.msra.mxu0 %v392
    %1034 = vmatpush.msra.mxu0 %v388
    %1035 = vmatpush.msra.mxu0 %v384
    %1036 = vmatpush.msra.mxu0 %v380
    %1037 = vmatpush.msra.mxu0 %v376
    %1038 = vmatpush.msra.mxu0 %v372
    %1039 = vmatpush.msra.mxu0 %v368
    %1040 = vmatpush.msra.mxu0 %v364
    %1041 = vmatpush.msra.mxu0 %v360
    %1042 = vmatpush.msra.mxu0 %v356
    %1043 = vmatpush.msra.mxu0 %v352
    %1044 = vmatpush.msra.mxu0 %v348
    %1045 = vmatpush.msra.mxu0 %v344
    %1046 = vmatpush.msra.mxu0 %v340
    %1047 = vmatmul.f32.gmra.mxu0 %v1006
    %v1048 = vpop.f32.mrf.mxu0
    %v1049 = vadd.f32 0.0, %v1048
    %1050 = vdwg.mxu0
    %1051 = vmatpush.msra.mxu0 %v401
    %1052 = vmatpush.msra.mxu0 %v397
    %1053 = vmatpush.msra.mxu0 %v393
    %1054 = vmatpush.msra.mxu0 %v389
    %1055 = vmatpush.msra.mxu0 %v385
    %1056 = vmatpush.msra.mxu0 %v381
    %1057 = vmatpush.msra.mxu0 %v377
    %1058 = vmatpush.msra.mxu0 %v373
    %1059 = vmatpush.msra.mxu0 %v369
    %1060 = vmatpush.msra.mxu0 %v365
    %1061 = vmatpush.msra.mxu0 %v361
    %1062 = vmatpush.msra.mxu0 %v357
    %1063 = vmatpush.msra.mxu0 %v353
    %1064 = vmatpush.msra.mxu0 %v349
    %1065 = vmatpush.msra.mxu0 %v345
    %1066 = vmatpush.msra.mxu0 %v341
    %1067 = vmatmul.f32.gmra.mxu0 %v1006
    %v1068 = vpop.f32.mrf.mxu0
    %v1069 = vadd.f32 0.0, %v1068
    %1070 = vdwg.mxu0
    %1071 = vmatpush.msra.mxu0 %v402
    %1072 = vmatpush.msra.mxu0 %v398
    %1073 = vmatpush.msra.mxu0 %v394
    %1074 = vmatpush.msra.mxu0 %v390
    %1075 = vmatpush.msra.mxu0 %v386
    %1076 = vmatpush.msra.mxu0 %v382
    %1077 = vmatpush.msra.mxu0 %v378
    %1078 = vmatpush.msra.mxu0 %v374
    %1079 = vmatpush.msra.mxu0 %v370
    %1080 = vmatpush.msra.mxu0 %v366
    %1081 = vmatpush.msra.mxu0 %v362
    %1082 = vmatpush.msra.mxu0 %v358
    %1083 = vmatpush.msra.mxu0 %v354
    %1084 = vmatpush.msra.mxu0 %v350
    %1085 = vmatpush.msra.mxu0 %v346
    %1086 = vmatpush.msra.mxu0 %v342
    %1087 = vmatmul.f32.gmra.mxu0 %v1006
    %v1088 = vpop.f32.mrf.mxu0
    %v1089 = vadd.f32 0.0, %v1088
    %1090 = vdwg.mxu0
    %v1091 = vadd.f32 %v1007, %v1029
    %v1092 = vadd.f32 %v1008, %v1049
    %v1093 = vadd.f32 %v1009, %v1069
    %v1094 = vadd.f32 %v1010, %v1089
    %v1095 = vxor.u32 %v1091, 2147483648
    %v1096 = vmul.f32 %v1095, 1.442695
    %v1097 = vpow.pop %v1096
    %v1098 = vadd.f32 %v1097, 1.0
    %v1099 = vrcp.pop %v1098
    %v1100 = vmul.f32 %v1098, %v1099
    %v1101 = vsub.f32 1.0, %v1100
    %v1102 = vmul.f32 %v1099, %v1101
    %v1103 = vadd.f32 %v1099, %v1102
    %vm1104 = vweird.f32 %v1098
    %vm1105 = vweird.f32 %v1099
    %vm1106 = vmor %vm1104, %vm1105
    %v1107 = vsel %vm1106, %v1099, %v1103
    %v1108 = vand.u32 2147483647, %v1098
    %vm1109 = vcmp.eq.f32.partialorder %v1108, 8.507059e+37
    %v1110 = vand.u32 %v1098, 2147483648
    %v1111 = vor.u32 1.1754944e-38, %v1110
    %v1112 = vsel %vm1109, %v1111, %v1107
    %v1113 = vmul.f32 1.0, %v1112
    %v1114 = vxor.u32 %v1092, 2147483648
    %v1115 = vmul.f32 %v1114, 1.442695
    %v1116 = vpow.pop %v1115
    %v1117 = vadd.f32 %v1116, 1.0
    %v1118 = vrcp.pop %v1117
    %v1119 = vmul.f32 %v1117, %v1118
    %v1120 = vsub.f32 1.0, %v1119
    %v1121 = vmul.f32 %v1118, %v1120
    %v1122 = vadd.f32 %v1118, %v1121
    %vm1123 = vweird.f32 %v1117
    %vm1124 = vweird.f32 %v1118
    %vm1125 = vmor %vm1123, %vm1124
    %v1126 = vsel %vm1125, %v1118, %v1122
    %v1127 = vand.u32 2147483647, %v1117
    %vm1128 = vcmp.eq.f32.partialorder %v1127, 8.507059e+37
    %v1129 = vand.u32 %v1117, 2147483648
    %v1130 = vor.u32 1.1754944e-38, %v1129
    %v1131 = vsel %vm1128, %v1130, %v1126
    %v1132 = vmul.f32 1.0, %v1131
    %v1133 = vtanh.pop %v1093
    %v1134 = vxor.u32 %v1094, 2147483648
    %v1135 = vmul.f32 %v1134, 1.442695
    %v1136 = vpow.pop %v1135
    %v1137 = vadd.f32 %v1136, 1.0
    %v1138 = vrcp.pop %v1137
    %v1139 = vmul.f32 %v1137, %v1138
    %v1140 = vsub.f32 1.0, %v1139
    %v1141 = vmul.f32 %v1138, %v1140
    %v1142 = vadd.f32 %v1138, %v1141
    %vm1143 = vweird.f32 %v1137
    %vm1144 = vweird.f32 %v1138
    %vm1145 = vmor %vm1143, %vm1144
    %v1146 = vsel %vm1145, %v1138, %v1142
    %v1147 = vand.u32 2147483647, %v1137
    %vm1148 = vcmp.eq.f32.partialorder %v1147, 8.507059e+37
    %v1149 = vand.u32 %v1137, 2147483648
    %v1150 = vor.u32 1.1754944e-38, %v1149
    %v1151 = vsel %vm1148, %v1150, %v1146
    %v1152 = vmul.f32 1.0, %v1151
    %v1153 = vmul.f32 %v1132, %v1004
    %v1154 = vmul.f32 %v1113, %v1133
    %v1155 = vadd.f32 %v1153, %v1154
    %v1156 = vtanh.pop %v1155
    %v1157 = vmul.f32 %v1152, %v1156
    %v1158 = vld [vmem:[#allocation2 + $0xa0] sm:$0xff]
    %v1159 = vld [vmem:[#allocation2 + $0xa8] sm:$0xff]
    %v1160 = vld [vmem:[#allocation2 + $0xb0] sm:$0xff]
    %v1161 = vld [vmem:[#allocation2 + $0xb8] sm:$0xff]
    %1162 = vmatpush.msra.mxu0 %v399
    %1163 = vmatpush.msra.mxu0 %v395
    %1164 = vmatpush.msra.mxu0 %v391
    %1165 = vmatpush.msra.mxu0 %v387
    %1166 = vmatpush.msra.mxu0 %v383
    %1167 = vmatpush.msra.mxu0 %v379
    %1168 = vmatpush.msra.mxu0 %v375
    %1169 = vmatpush.msra.mxu0 %v371
    %1170 = vmatpush.msra.mxu0 %v367
    %1171 = vmatpush.msra.mxu0 %v363
    %1172 = vmatpush.msra.mxu0 %v359
    %1173 = vmatpush.msra.mxu0 %v355
    %1174 = vmatpush.msra.mxu0 %v351
    %1175 = vmatpush.msra.mxu0 %v347
    %1176 = vmatpush.msra.mxu0 %v343
    %1177 = vmatpush.msra.mxu0 %v339
    %1178 = vmatmul.f32.gmra.mxu0 %v1157
    %v1179 = vpop.f32.mrf.mxu0
    %v1180 = vadd.f32 0.0, %v1179
    %1181 = vdwg.mxu0
    %1182 = vmatpush.msra.mxu0 %v400
    %1183 = vmatpush.msra.mxu0 %v396
    %1184 = vmatpush.msra.mxu0 %v392
    %1185 = vmatpush.msra.mxu0 %v388
    %1186 = vmatpush.msra.mxu0 %v384
    %1187 = vmatpush.msra.mxu0 %v380
    %1188 = vmatpush.msra.mxu0 %v376
    %1189 = vmatpush.msra.mxu0 %v372
    %1190 = vmatpush.msra.mxu0 %v368
    %1191 = vmatpush.msra.mxu0 %v364
    %1192 = vmatpush.msra.mxu0 %v360
    %1193 = vmatpush.msra.mxu0 %v356
    %1194 = vmatpush.msra.mxu0 %v352
    %1195 = vmatpush.msra.mxu0 %v348
    %1196 = vmatpush.msra.mxu0 %v344
    %1197 = vmatpush.msra.mxu0 %v340
    %1198 = vmatmul.f32.gmra.mxu0 %v1157
    %v1199 = vpop.f32.mrf.mxu0
    %v1200 = vadd.f32 0.0, %v1199
    %1201 = vdwg.mxu0
    %1202 = vmatpush.msra.mxu0 %v401
    %1203 = vmatpush.msra.mxu0 %v397
    %1204 = vmatpush.msra.mxu0 %v393
    %1205 = vmatpush.msra.mxu0 %v389
    %1206 = vmatpush.msra.mxu0 %v385
    %1207 = vmatpush.msra.mxu0 %v381
    %1208 = vmatpush.msra.mxu0 %v377
    %1209 = vmatpush.msra.mxu0 %v373
    %1210 = vmatpush.msra.mxu0 %v369
    %1211 = vmatpush.msra.mxu0 %v365
    %1212 = vmatpush.msra.mxu0 %v361
    %1213 = vmatpush.msra.mxu0 %v357
    %1214 = vmatpush.msra.mxu0 %v353
    %1215 = vmatpush.msra.mxu0 %v349
    %1216 = vmatpush.msra.mxu0 %v345
    %1217 = vmatpush.msra.mxu0 %v341
    %1218 = vmatmul.f32.gmra.mxu0 %v1157
    %v1219 = vpop.f32.mrf.mxu0
    %v1220 = vadd.f32 0.0, %v1219
    %1221 = vdwg.mxu0
    %1222 = vmatpush.msra.mxu0 %v402
    %1223 = vmatpush.msra.mxu0 %v398
    %1224 = vmatpush.msra.mxu0 %v394
    %1225 = vmatpush.msra.mxu0 %v390
    %1226 = vmatpush.msra.mxu0 %v386
    %1227 = vmatpush.msra.mxu0 %v382
    %1228 = vmatpush.msra.mxu0 %v378
    %1229 = vmatpush.msra.mxu0 %v374
    %1230 = vmatpush.msra.mxu0 %v370
    %1231 = vmatpush.msra.mxu0 %v366
    %1232 = vmatpush.msra.mxu0 %v362
    %1233 = vmatpush.msra.mxu0 %v358
    %1234 = vmatpush.msra.mxu0 %v354
    %1235 = vmatpush.msra.mxu0 %v350
    %1236 = vmatpush.msra.mxu0 %v346
    %1237 = vmatpush.msra.mxu0 %v342
    %1238 = vmatmul.f32.gmra.mxu0 %v1157
    %v1239 = vpop.f32.mrf.mxu0
    %v1240 = vadd.f32 0.0, %v1239
    %1241 = vdwg.mxu0
    %v1242 = vadd.f32 %v1158, %v1180
    %v1243 = vadd.f32 %v1159, %v1200
    %v1244 = vadd.f32 %v1160, %v1220
    %v1245 = vadd.f32 %v1161, %v1240
    %v1246 = vxor.u32 %v1242, 2147483648
    %v1247 = vmul.f32 %v1246, 1.442695
    %v1248 = vpow.pop %v1247
    %v1249 = vadd.f32 %v1248, 1.0
    %v1250 = vrcp.pop %v1249
    %v1251 = vmul.f32 %v1249, %v1250
    %v1252 = vsub.f32 1.0, %v1251
    %v1253 = vmul.f32 %v1250, %v1252
    %v1254 = vadd.f32 %v1250, %v1253
    %vm1255 = vweird.f32 %v1249
    %vm1256 = vweird.f32 %v1250
    %vm1257 = vmor %vm1255, %vm1256
    %v1258 = vsel %vm1257, %v1250, %v1254
    %v1259 = vand.u32 2147483647, %v1249
    %vm1260 = vcmp.eq.f32.partialorder %v1259, 8.507059e+37
    %v1261 = vand.u32 %v1249, 2147483648
    %v1262 = vor.u32 1.1754944e-38, %v1261
    %v1263 = vsel %vm1260, %v1262, %v1258
    %v1264 = vmul.f32 1.0, %v1263
    %v1265 = vxor.u32 %v1243, 2147483648
    %v1266 = vmul.f32 %v1265, 1.442695
    %v1267 = vpow.pop %v1266
    %v1268 = vadd.f32 %v1267, 1.0
    %v1269 = vrcp.pop %v1268
    %v1270 = vmul.f32 %v1268, %v1269
    %v1271 = vsub.f32 1.0, %v1270
    %v1272 = vmul.f32 %v1269, %v1271
    %v1273 = vadd.f32 %v1269, %v1272
    %vm1274 = vweird.f32 %v1268
    %vm1275 = vweird.f32 %v1269
    %vm1276 = vmor %vm1274, %vm1275
    %v1277 = vsel %vm1276, %v1269, %v1273
    %v1278 = vand.u32 2147483647, %v1268
    %vm1279 = vcmp.eq.f32.partialorder %v1278, 8.507059e+37
    %v1280 = vand.u32 %v1268, 2147483648
    %v1281 = vor.u32 1.1754944e-38, %v1280
    %v1282 = vsel %vm1279, %v1281, %v1277
    %v1283 = vmul.f32 1.0, %v1282
    %v1284 = vtanh.pop %v1244
    %v1285 = vxor.u32 %v1245, 2147483648
    %v1286 = vmul.f32 %v1285, 1.442695
    %v1287 = vpow.pop %v1286
    %v1288 = vadd.f32 %v1287, 1.0
    %v1289 = vrcp.pop %v1288
    %v1290 = vmul.f32 %v1288, %v1289
    %v1291 = vsub.f32 1.0, %v1290
    %v1292 = vmul.f32 %v1289, %v1291
    %v1293 = vadd.f32 %v1289, %v1292
    %vm1294 = vweird.f32 %v1288
    %vm1295 = vweird.f32 %v1289
    %vm1296 = vmor %vm1294, %vm1295
    %v1297 = vsel %vm1296, %v1289, %v1293
    %v1298 = vand.u32 2147483647, %v1288
    %vm1299 = vcmp.eq.f32.partialorder %v1298, 8.507059e+37
    %v1300 = vand.u32 %v1288, 2147483648
    %v1301 = vor.u32 1.1754944e-38, %v1300
    %v1302 = vsel %vm1299, %v1301, %v1297
    %v1303 = vmul.f32 1.0, %v1302
    %v1304 = vmul.f32 %v1283, %v1155
    %v1305 = vmul.f32 %v1264, %v1284
    %v1306 = vadd.f32 %v1304, %v1305
    %v1307 = vtanh.pop %v1306
    %v1308 = vmul.f32 %v1303, %v1307
    %v1309 = vld [vmem:[#allocation2 + $0xc0] sm:$0xff]
    %v1310 = vld [vmem:[#allocation2 + $0xc8] sm:$0xff]
    %v1311 = vld [vmem:[#allocation2 + $0xd0] sm:$0xff]
    %v1312 = vld [vmem:[#allocation2 + $0xd8] sm:$0xff]
    %1313 = vmatpush.msra.mxu0 %v399
    %1314 = vmatpush.msra.mxu0 %v395
    %1315 = vmatpush.msra.mxu0 %v391
    %1316 = vmatpush.msra.mxu0 %v387
    %1317 = vmatpush.msra.mxu0 %v383
    %1318 = vmatpush.msra.mxu0 %v379
    %1319 = vmatpush.msra.mxu0 %v375
    %1320 = vmatpush.msra.mxu0 %v371
    %1321 = vmatpush.msra.mxu0 %v367
    %1322 = vmatpush.msra.mxu0 %v363
    %1323 = vmatpush.msra.mxu0 %v359
    %1324 = vmatpush.msra.mxu0 %v355
    %1325 = vmatpush.msra.mxu0 %v351
    %1326 = vmatpush.msra.mxu0 %v347
    %1327 = vmatpush.msra.mxu0 %v343
    %1328 = vmatpush.msra.mxu0 %v339
    %1329 = vmatmul.f32.gmra.mxu0 %v1308
    %v1330 = vpop.f32.mrf.mxu0
    %v1331 = vadd.f32 0.0, %v1330
    %1332 = vdwg.mxu0
    %1333 = vmatpush.msra.mxu0 %v400
    %1334 = vmatpush.msra.mxu0 %v396
    %1335 = vmatpush.msra.mxu0 %v392
    %1336 = vmatpush.msra.mxu0 %v388
    %1337 = vmatpush.msra.mxu0 %v384
    %1338 = vmatpush.msra.mxu0 %v380
    %1339 = vmatpush.msra.mxu0 %v376
    %1340 = vmatpush.msra.mxu0 %v372
    %1341 = vmatpush.msra.mxu0 %v368
    %1342 = vmatpush.msra.mxu0 %v364
    %1343 = vmatpush.msra.mxu0 %v360
    %1344 = vmatpush.msra.mxu0 %v356
    %1345 = vmatpush.msra.mxu0 %v352
    %1346 = vmatpush.msra.mxu0 %v348
    %1347 = vmatpush.msra.mxu0 %v344
    %1348 = vmatpush.msra.mxu0 %v340
    %1349 = vmatmul.f32.gmra.mxu0 %v1308
    %v1350 = vpop.f32.mrf.mxu0
    %v1351 = vadd.f32 0.0, %v1350
    %1352 = vdwg.mxu0
    %1353 = vmatpush.msra.mxu0 %v401
    %1354 = vmatpush.msra.mxu0 %v397
    %1355 = vmatpush.msra.mxu0 %v393
    %1356 = vmatpush.msra.mxu0 %v389
    %1357 = vmatpush.msra.mxu0 %v385
    %1358 = vmatpush.msra.mxu0 %v381
    %1359 = vmatpush.msra.mxu0 %v377
    %1360 = vmatpush.msra.mxu0 %v373
    %1361 = vmatpush.msra.mxu0 %v369
    %1362 = vmatpush.msra.mxu0 %v365
    %1363 = vmatpush.msra.mxu0 %v361
    %1364 = vmatpush.msra.mxu0 %v357
    %1365 = vmatpush.msra.mxu0 %v353
    %1366 = vmatpush.msra.mxu0 %v349
    %1367 = vmatpush.msra.mxu0 %v345
    %1368 = vmatpush.msra.mxu0 %v341
    %1369 = vmatmul.f32.gmra.mxu0 %v1308
    %v1370 = vpop.f32.mrf.mxu0
    %v1371 = vadd.f32 0.0, %v1370
    %1372 = vdwg.mxu0
    %1373 = vmatpush.msra.mxu0 %v402
    %1374 = vmatpush.msra.mxu0 %v398
    %1375 = vmatpush.msra.mxu0 %v394
    %1376 = vmatpush.msra.mxu0 %v390
    %1377 = vmatpush.msra.mxu0 %v386
    %1378 = vmatpush.msra.mxu0 %v382
    %1379 = vmatpush.msra.mxu0 %v378
    %1380 = vmatpush.msra.mxu0 %v374
    %1381 = vmatpush.msra.mxu0 %v370
    %1382 = vmatpush.msra.mxu0 %v366
    %1383 = vmatpush.msra.mxu0 %v362
    %1384 = vmatpush.msra.mxu0 %v358
    %1385 = vmatpush.msra.mxu0 %v354
    %1386 = vmatpush.msra.mxu0 %v350
    %1387 = vmatpush.msra.mxu0 %v346
    %1388 = vmatpush.msra.mxu0 %v342
    %1389 = vmatmul.f32.gmra.mxu0 %v1308
    %v1390 = vpop.f32.mrf.mxu0
    %v1391 = vadd.f32 0.0, %v1390
    %1392 = vdwg.mxu0
    %v1393 = vadd.f32 %v1309, %v1331
    %v1394 = vadd.f32 %v1310, %v1351
    %v1395 = vadd.f32 %v1311, %v1371
    %v1396 = vadd.f32 %v1312, %v1391
    %v1397 = vxor.u32 %v1393, 2147483648
    %v1398 = vmul.f32 %v1397, 1.442695
    %v1399 = vpow.pop %v1398
    %v1400 = vadd.f32 %v1399, 1.0
    %v1401 = vrcp.pop %v1400
    %v1402 = vmul.f32 %v1400, %v1401
    %v1403 = vsub.f32 1.0, %v1402
    %v1404 = vmul.f32 %v1401, %v1403
    %v1405 = vadd.f32 %v1401, %v1404
    %vm1406 = vweird.f32 %v1400
    %vm1407 = vweird.f32 %v1401
    %vm1408 = vmor %vm1406, %vm1407
    %v1409 = vsel %vm1408, %v1401, %v1405
    %v1410 = vand.u32 2147483647, %v1400
    %vm1411 = vcmp.eq.f32.partialorder %v1410, 8.507059e+37
    %v1412 = vand.u32 %v1400, 2147483648
    %v1413 = vor.u32 1.1754944e-38, %v1412
    %v1414 = vsel %vm1411, %v1413, %v1409
    %v1415 = vmul.f32 1.0, %v1414
    %v1416 = vxor.u32 %v1394, 2147483648
    %v1417 = vmul.f32 %v1416, 1.442695
    %v1418 = vpow.pop %v1417
    %v1419 = vadd.f32 %v1418, 1.0
    %v1420 = vrcp.pop %v1419
    %v1421 = vmul.f32 %v1419, %v1420
    %v1422 = vsub.f32 1.0, %v1421
    %v1423 = vmul.f32 %v1420, %v1422
    %v1424 = vadd.f32 %v1420, %v1423
    %vm1425 = vweird.f32 %v1419
    %vm1426 = vweird.f32 %v1420
    %vm1427 = vmor %vm1425, %vm1426
    %v1428 = vsel %vm1427, %v1420, %v1424
    %v1429 = vand.u32 2147483647, %v1419
    %vm1430 = vcmp.eq.f32.partialorder %v1429, 8.507059e+37
    %v1431 = vand.u32 %v1419, 2147483648
    %v1432 = vor.u32 1.1754944e-38, %v1431
    %v1433 = vsel %vm1430, %v1432, %v1428
    %v1434 = vmul.f32 1.0, %v1433
    %v1435 = vtanh.pop %v1395
    %v1436 = vxor.u32 %v1396, 2147483648
    %v1437 = vmul.f32 %v1436, 1.442695
    %v1438 = vpow.pop %v1437
    %v1439 = vadd.f32 %v1438, 1.0
    %v1440 = vrcp.pop %v1439
    %v1441 = vmul.f32 %v1439, %v1440
    %v1442 = vsub.f32 1.0, %v1441
    %v1443 = vmul.f32 %v1440, %v1442
    %v1444 = vadd.f32 %v1440, %v1443
    %vm1445 = vweird.f32 %v1439
    %vm1446 = vweird.f32 %v1440
    %vm1447 = vmor %vm1445, %vm1446
    %v1448 = vsel %vm1447, %v1440, %v1444
    %v1449 = vand.u32 2147483647, %v1439
    %vm1450 = vcmp.eq.f32.partialorder %v1449, 8.507059e+37
    %v1451 = vand.u32 %v1439, 2147483648
    %v1452 = vor.u32 1.1754944e-38, %v1451
    %v1453 = vsel %vm1450, %v1452, %v1448
    %v1454 = vmul.f32 1.0, %v1453
    %v1455 = vmul.f32 %v1434, %v1306
    %v1456 = vmul.f32 %v1415, %v1435
    %v1457 = vadd.f32 %v1455, %v1456
    %v1458 = vtanh.pop %v1457
    %v1459 = vmul.f32 %v1454, %v1458
    %v1460 = vld [vmem:[#allocation2 + $0xe0] sm:$0xff]
    %v1461 = vld [vmem:[#allocation2 + $0xe8] sm:$0xff]
    %v1462 = vld [vmem:[#allocation2 + $0xf0] sm:$0xff]
    %v1463 = vld [vmem:[#allocation2 + $0xf8] sm:$0xff]
    %1464 = vmatpush.msra.mxu0 %v399
    %1465 = vmatpush.msra.mxu0 %v395
    %1466 = vmatpush.msra.mxu0 %v391
    %1467 = vmatpush.msra.mxu0 %v387
    %1468 = vmatpush.msra.mxu0 %v383
    %1469 = vmatpush.msra.mxu0 %v379
    %1470 = vmatpush.msra.mxu0 %v375
    %1471 = vmatpush.msra.mxu0 %v371
    %1472 = vmatpush.msra.mxu0 %v367
    %1473 = vmatpush.msra.mxu0 %v363
    %1474 = vmatpush.msra.mxu0 %v359
    %1475 = vmatpush.msra.mxu0 %v355
    %1476 = vmatpush.msra.mxu0 %v351
    %1477 = vmatpush.msra.mxu0 %v347
    %1478 = vmatpush.msra.mxu0 %v343
    %1479 = vmatpush.msra.mxu0 %v339
    %1480 = vmatmul.f32.gmra.mxu0 %v1459
    %v1481 = vpop.f32.mrf.mxu0
    %v1482 = vadd.f32 0.0, %v1481
    %1483 = vdwg.mxu0
    %1484 = vmatpush.msra.mxu0 %v400
    %1485 = vmatpush.msra.mxu0 %v396
    %1486 = vmatpush.msra.mxu0 %v392
    %1487 = vmatpush.msra.mxu0 %v388
    %1488 = vmatpush.msra.mxu0 %v384
    %1489 = vmatpush.msra.mxu0 %v380
    %1490 = vmatpush.msra.mxu0 %v376
    %1491 = vmatpush.msra.mxu0 %v372
    %1492 = vmatpush.msra.mxu0 %v368
    %1493 = vmatpush.msra.mxu0 %v364
    %1494 = vmatpush.msra.mxu0 %v360
    %1495 = vmatpush.msra.mxu0 %v356
    %1496 = vmatpush.msra.mxu0 %v352
    %1497 = vmatpush.msra.mxu0 %v348
    %1498 = vmatpush.msra.mxu0 %v344
    %1499 = vmatpush.msra.mxu0 %v340
    %1500 = vmatmul.f32.gmra.mxu0 %v1459
    %v1501 = vpop.f32.mrf.mxu0
    %v1502 = vadd.f32 0.0, %v1501
    %1503 = vdwg.mxu0
    %1504 = vmatpush.msra.mxu0 %v401
    %1505 = vmatpush.msra.mxu0 %v397
    %1506 = vmatpush.msra.mxu0 %v393
    %1507 = vmatpush.msra.mxu0 %v389
    %1508 = vmatpush.msra.mxu0 %v385
    %1509 = vmatpush.msra.mxu0 %v381
    %1510 = vmatpush.msra.mxu0 %v377
    %1511 = vmatpush.msra.mxu0 %v373
    %1512 = vmatpush.msra.mxu0 %v369
    %1513 = vmatpush.msra.mxu0 %v365
    %1514 = vmatpush.msra.mxu0 %v361
    %1515 = vmatpush.msra.mxu0 %v357
    %1516 = vmatpush.msra.mxu0 %v353
    %1517 = vmatpush.msra.mxu0 %v349
    %1518 = vmatpush.msra.mxu0 %v345
    %1519 = vmatpush.msra.mxu0 %v341
    %1520 = vmatmul.f32.gmra.mxu0 %v1459
    %v1521 = vpop.f32.mrf.mxu0
    %v1522 = vadd.f32 0.0, %v1521
    %1523 = vdwg.mxu0
    %1524 = vmatpush.msra.mxu0 %v402
    %1525 = vmatpush.msra.mxu0 %v398
    %1526 = vmatpush.msra.mxu0 %v394
    %1527 = vmatpush.msra.mxu0 %v390
    %1528 = vmatpush.msra.mxu0 %v386
    %1529 = vmatpush.msra.mxu0 %v382
    %1530 = vmatpush.msra.mxu0 %v378
    %1531 = vmatpush.msra.mxu0 %v374
    %1532 = vmatpush.msra.mxu0 %v370
    %1533 = vmatpush.msra.mxu0 %v366
    %1534 = vmatpush.msra.mxu0 %v362
    %1535 = vmatpush.msra.mxu0 %v358
    %1536 = vmatpush.msra.mxu0 %v354
    %1537 = vmatpush.msra.mxu0 %v350
    %1538 = vmatpush.msra.mxu0 %v346
    %1539 = vmatpush.msra.mxu0 %v342
    %1540 = vmatmul.f32.gmra.mxu0 %v1459
    %v1541 = vpop.f32.mrf.mxu0
    %v1542 = vadd.f32 0.0, %v1541
    %1543 = vdwg.mxu0
    %v1544 = vadd.f32 %v1460, %v1482
    %v1545 = vadd.f32 %v1461, %v1502
    %v1546 = vadd.f32 %v1462, %v1522
    %v1547 = vadd.f32 %v1463, %v1542
    %v1548 = vxor.u32 %v1544, 2147483648
    %v1549 = vmul.f32 %v1548, 1.442695
    %v1550 = vpow.pop %v1549
    %v1551 = vadd.f32 %v1550, 1.0
    %v1552 = vrcp.pop %v1551
    %v1553 = vmul.f32 %v1551, %v1552
    %v1554 = vsub.f32 1.0, %v1553
    %v1555 = vmul.f32 %v1552, %v1554
    %v1556 = vadd.f32 %v1552, %v1555
    %vm1557 = vweird.f32 %v1551
    %vm1558 = vweird.f32 %v1552
    %vm1559 = vmor %vm1557, %vm1558
    %v1560 = vsel %vm1559, %v1552, %v1556
    %v1561 = vand.u32 2147483647, %v1551
    %vm1562 = vcmp.eq.f32.partialorder %v1561, 8.507059e+37
    %v1563 = vand.u32 %v1551, 2147483648
    %v1564 = vor.u32 1.1754944e-38, %v1563
    %v1565 = vsel %vm1562, %v1564, %v1560
    %v1566 = vmul.f32 1.0, %v1565
    %v1567 = vxor.u32 %v1545, 2147483648
    %v1568 = vmul.f32 %v1567, 1.442695
    %v1569 = vpow.pop %v1568
    %v1570 = vadd.f32 %v1569, 1.0
    %v1571 = vrcp.pop %v1570
    %v1572 = vmul.f32 %v1570, %v1571
    %v1573 = vsub.f32 1.0, %v1572
    %v1574 = vmul.f32 %v1571, %v1573
    %v1575 = vadd.f32 %v1571, %v1574
    %vm1576 = vweird.f32 %v1570
    %vm1577 = vweird.f32 %v1571
    %vm1578 = vmor %vm1576, %vm1577
    %v1579 = vsel %vm1578, %v1571, %v1575
    %v1580 = vand.u32 2147483647, %v1570
    %vm1581 = vcmp.eq.f32.partialorder %v1580, 8.507059e+37
    %v1582 = vand.u32 %v1570, 2147483648
    %v1583 = vor.u32 1.1754944e-38, %v1582
    %v1584 = vsel %vm1581, %v1583, %v1579
    %v1585 = vmul.f32 1.0, %v1584
    %v1586 = vtanh.pop %v1546
    %v1587 = vxor.u32 %v1547, 2147483648
    %v1588 = vmul.f32 %v1587, 1.442695
    %v1589 = vpow.pop %v1588
    %v1590 = vadd.f32 %v1589, 1.0
    %v1591 = vrcp.pop %v1590
    %v1592 = vmul.f32 %v1590, %v1591
    %v1593 = vsub.f32 1.0, %v1592
    %v1594 = vmul.f32 %v1591, %v1593
    %v1595 = vadd.f32 %v1591, %v1594
    %vm1596 = vweird.f32 %v1590
    %vm1597 = vweird.f32 %v1591
    %vm1598 = vmor %vm1596, %vm1597
    %v1599 = vsel %vm1598, %v1591, %v1595
    %v1600 = vand.u32 2147483647, %v1590
    %vm1601 = vcmp.eq.f32.partialorder %v1600, 8.507059e+37
    %v1602 = vand.u32 %v1590, 2147483648
    %v1603 = vor.u32 1.1754944e-38, %v1602
    %v1604 = vsel %vm1601, %v1603, %v1599
    %v1605 = vmul.f32 1.0, %v1604
    %v1606 = vmul.f32 %v1585, %v1457
    %v1607 = vmul.f32 %v1566, %v1586
    %v1608 = vadd.f32 %v1606, %v1607
    %v1609 = vtanh.pop %v1608
    %v1610 = vmul.f32 %v1605, %v1609
    %s1611 = smul.u32 136, 1
    %s1612 = sshll.u32 %s1611, 4
    %1613 = dma.done %s42, %s1612
    %v1614 = vld [vmem:[#allocation4] sm:$0xff]
    %v1615 = vld [vmem:[#allocation4 + $0x8] sm:$0xff]
    %v1616 = vld [vmem:[#allocation4 + $0x10] sm:$0xff]
    %v1617 = vld [vmem:[#allocation4 + $0x18] sm:$0xff]
    %v1618 = vld [vmem:[#allocation4 + $0x20] sm:$0xff]
    %v1619 = vld [vmem:[#allocation4 + $0x28] sm:$0xff]
    %v1620 = vld [vmem:[#allocation4 + $0x30] sm:$0xff]
    %v1621 = vld [vmem:[#allocation4 + $0x38] sm:$0xff]
    %v1622 = vld [vmem:[#allocation4 + $0x40] sm:$0xff]
    %v1623 = vld [vmem:[#allocation4 + $0x48] sm:$0xff]
    %v1624 = vld [vmem:[#allocation4 + $0x50] sm:$0xff]
    %v1625 = vld [vmem:[#allocation4 + $0x58] sm:$0xff]
    %v1626 = vld [vmem:[#allocation4 + $0x60] sm:$0xff]
    %v1627 = vld [vmem:[#allocation4 + $0x68] sm:$0xff]
    %v1628 = vld [vmem:[#allocation4 + $0x70] sm:$0xff]
    %v1629 = vld [vmem:[#allocation4 + $0x78] sm:$0xff]
    %v1630 = vld [vmem:[#allocation4 + $0x80] sm:$0x1]
    %v1631 = vperm.slane %v1630, 0
    %1632 = vmatpush.msra.mxu0 %v1629
    %1633 = vmatpush.msra.mxu0 %v1628
    %1634 = vmatpush.msra.mxu0 %v1627
    %1635 = vmatpush.msra.mxu0 %v1626
    %1636 = vmatpush.msra.mxu0 %v1625
    %1637 = vmatpush.msra.mxu0 %v1624
    %1638 = vmatpush.msra.mxu0 %v1623
    %1639 = vmatpush.msra.mxu0 %v1622
    %1640 = vmatpush.msra.mxu0 %v1621
    %1641 = vmatpush.msra.mxu0 %v1620
    %1642 = vmatpush.msra.mxu0 %v1619
    %1643 = vmatpush.msra.mxu0 %v1618
    %1644 = vmatpush.msra.mxu0 %v1617
    %1645 = vmatpush.msra.mxu0 %v1616
    %1646 = vmatpush.msra.mxu0 %v1615
    %1647 = vmatpush.msra.mxu0 %v1614
    %1648 = vmatmul.f32.gmra.mxu0 %v1610
    %v1649 = vpop.f32.mrf.mxu0
    %v1650 = vadd.f32 %v1631, %v1649
    %1651 = vdwg.mxu0
    %1652 = vst [vmem:[%s4] sm:$0xff] %v1650
    // Predicated region
    $region22: #{emotion_classifier_forward.1} parent=1 // pred_check
      _
    $region23: #{emotion_classifier_forward.1} parent=1 // pred_check_branch
      %1654 = sbr.rel (0) target = $region25
    $region24: #{emotion_classifier_forward.1} parent=1 // pred_region
      _
    $region25: #{emotion_classifier_forward.1} parent=1 // pred_fallthru
      _
    // Predicated region
    $region26: #{emotion_classifier_forward.1} parent=1 // pred_check
      _
    $region27: #{emotion_classifier_forward.1} parent=1 // pred_check_branch
      %1656 = sbr.rel (0) target = $region29
    $region28: #{emotion_classifier_forward.1} parent=1 // pred_region
      _
    $region29: #{emotion_classifier_forward.1} parent=1 // pred_fallthru
      _
    %1657 = vsyncpa [#allocation7], 1
  %1658 = vsyncmov [#allocation5]
  %s1659 = vpop.sfrf %1658
  %p1660 = scmp.eq.s32.totalorder %s1659, 0
  %p1661 = pneg %p1660
  %1663 = shalt.err (%p1661)
  %s1664 = scalar_lea.sflag [#allocation5], 1
  %1665 = vsyncmov %s1664
  %s1666 = vpop.sfrf %1665
  %p1667 = scmp.eq.s32.totalorder %s1666, 0
  %p1668 = pneg %p1667
  %1670 = shalt.err (%p1668)

</llo_original>
